<compile_context>
chip_gen: v7x
topology: tpu7x:2x2x1
jax: 0.10.0
libtpu: 0.0.40
codegen_flags: <defaults>
</compile_context>

<pallas_src>
import math
import functools

import jax
import jax.numpy as jnp
from jax import lax
from jax.experimental import pallas as pl
from jax.experimental.pallas import tpu as pltpu


# ------------------------------ Pallas kernel -------------------------------

def _mha_fused_kernel(q_ref, k_ref, v_ref,
                      wq_ref, bq_ref, wk_ref, bk_ref, wv_ref, bv_ref,
                      wo_ref, bo_ref,
                      o_ref, *, n_heads, scale):
    # One batch element per grid step.
    xq = q_ref[0]                                    # (S, hs)
    xk = k_ref[0]                                    # (S, hs)
    xv = v_ref[0]                                    # (S, hs)

    # QKV projections (weights already (in, out); PyTorch Linear: x @ W.T + b).
    qp = jnp.dot(xq, wq_ref[...], preferred_element_type=jnp.float32) + bq_ref[...]
    kp = jnp.dot(xk, wk_ref[...], preferred_element_type=jnp.float32) + bk_ref[...]
    vp = jnp.dot(xv, wv_ref[...], preferred_element_type=jnp.float32) + bv_ref[...]

    s_len, hs = qp.shape
    dv = hs // n_heads

    # Per-head attention via static lane slices (unrolled at trace time; H is small).
    head_outs = []
    for h in range(n_heads):
        sl = slice(h * dv, (h + 1) * dv)
        qh = qp[:, sl]                               # (S, dv)
        kh = kp[:, sl]                               # (S, dv)
        vh = vp[:, sl]                               # (S, dv)

        # scores = qh @ kh^T, expressed as a contraction on the last dims (no .T).
        scores = lax.dot_general(
            qh, kh, (((1,), (1,)), ((), ())),
            preferred_element_type=jnp.float32) * scale        # (S, S)

        m = jnp.max(scores, axis=-1, keepdims=True)
        p = jnp.exp(scores - m)
        denom = jnp.sum(p, axis=-1, keepdims=True)
        p = p * pl.reciprocal(denom, approx=True)

        head_outs.append(jnp.dot(p, vh, preferred_element_type=jnp.float32))

    ctx = jnp.concatenate(head_outs, axis=-1)        # (S, hs), lane-dense

    # Output projection.
    out = jnp.dot(ctx, wo_ref[...], preferred_element_type=jnp.float32) + bo_ref[...]
    o_ref[0] = out.astype(o_ref.dtype)


# ------------------------------ JAX wrapper ----------------------------------

def multihead_attention(query, key, value, params, n_heads):
    """Forward pass equivalent to the PyTorch multiheadattention module
    (mask=None, dropout=None). One fused pallas_call, grid over batch."""
    B, S, hs = query.shape
    dv = hs // n_heads
    (wq, bq), (wk, bk), (wv, bv), (wo, bo) = params

    # Pre-transpose PyTorch [out, in] weights to [in, out] once (outside the kernel)
    # so the kernel never transposes on the XLU.
    wq_t, wk_t, wv_t, wo_t = wq.T, wk.T, wv.T, wo.T
    bq2 = bq.reshape(1, hs)
    bk2 = bk.reshape(1, hs)
    bv2 = bv.reshape(1, hs)
    bo2 = bo.reshape(1, hs)

    kern = functools.partial(_mha_fused_kernel,
                             n_heads=n_heads, scale=1.0 / math.sqrt(dv))

    act_spec = pl.BlockSpec((1, S, hs), lambda b: (b, 0, 0))
    w_spec = pl.BlockSpec((hs, hs), lambda b: (0, 0))
    b_spec = pl.BlockSpec((1, hs), lambda b: (0, 0))

    return pl.pallas_call(
        kern,
        out_shape=jax.ShapeDtypeStruct((B, S, hs), jnp.float32),
        grid=(B,),
        in_specs=[act_spec, act_spec, act_spec,
                  w_spec, b_spec,     # wq, bq
                  w_spec, b_spec,     # wk, bk
                  w_spec, b_spec,     # wv, bv
                  w_spec, b_spec],    # wo, bo
        out_specs=pl.BlockSpec((1, S, hs), lambda b: (b, 0, 0)),
        compiler_params=pltpu.CompilerParams(
            dimension_semantics=("parallel",)),
    )(query, key, value, wq_t, bq2, wk_t, bk2, wv_t, bv2, wo_t, bo2)


# ------------------------------ reference ------------------------------------

def _reference(query, key, value, params, n_heads):
    B, S, hs = query.shape
    dv = hs // n_heads
    (wq, bq), (wk, bk), (wv, bv), (wo, bo) = params

    def lin(x, w, b):
        return x @ w.T + b

    def split_heads(x):
        return jnp.transpose(x.reshape(B, S, n_heads, dv), (0, 2, 1, 3))

    q = split_heads(lin(query, wq, bq))
    k = split_heads(lin(key, wk, bk))
    v = split_heads(lin(value, wv, bv))
    s = jnp.einsum("bhqd,bhkd->bhqk", q, k) / math.sqrt(dv)
    p = jax.nn.softmax(s, axis=-1)
    o = jnp.einsum("bhqk,bhkd->bhqd", p, v)
    o = jnp.transpose(o, (0, 2, 1, 3)).reshape(B, S, hs)
    return lin(o, wo, bo)


# -------------------------------- main ----------------------------------------

if __name__ == "__main__":
    B, S, hs, n_heads = 2, 8, 32, 4

    key0 = jax.random.PRNGKey(0)
    keys = jax.random.split(key0, 16)

    bound = 1.0 / math.sqrt(hs)

    def mk_linear(kw, kb):
        w = jax.random.uniform(kw, (hs, hs), jnp.float32, -bound, bound)
        b = jax.random.uniform(kb, (hs,), jnp.float32, -bound, bound)
        return (w, b)

    params = tuple(mk_linear(keys[2 * i], keys[2 * i + 1]) for i in range(4))

    q = jax.random.normal(keys[8], (B, S, hs), jnp.float32)
    k = jax.random.normal(keys[9], (B, S, hs), jnp.float32)
    v = jax.random.normal(keys[10], (B, S, hs), jnp.float32)

    out = multihead_attention(q, k, v, params, n_heads)
    out = jax.block_until_ready(out)

    ref = _reference(q, k, v, params, n_heads)
    assert out.shape == (B, S, hs)
    # approx reciprocal in the softmax denominator -> slightly looser tolerance.
    assert jnp.allclose(out, ref, atol=2e-3, rtol=2e-3), "mismatch vs reference"

    print("KERNEL_OK")
</pallas_src>

<mosaic_0001>
module attributes {stable_mosaic.version = 11 : i64} {
  func.func @_mha_fused_kernel(%arg0: i32, %arg1: memref<1x8x32xf32, #tpu.memory_space<vmem>>, %arg2: memref<1x8x32xf32, #tpu.memory_space<vmem>>, %arg3: memref<1x8x32xf32, #tpu.memory_space<vmem>>, %arg4: memref<32x32xf32, #tpu.memory_space<vmem>>, %arg5: memref<1x32xf32, #tpu.memory_space<vmem>>, %arg6: memref<32x32xf32, #tpu.memory_space<vmem>>, %arg7: memref<1x32xf32, #tpu.memory_space<vmem>>, %arg8: memref<32x32xf32, #tpu.memory_space<vmem>>, %arg9: memref<1x32xf32, #tpu.memory_space<vmem>>, %arg10: memref<32x32xf32, #tpu.memory_space<vmem>>, %arg11: memref<1x32xf32, #tpu.memory_space<vmem>>, %arg12: memref<1x8x32xf32, #tpu.memory_space<vmem>>) attributes {dimension_semantics = [#tpu.dimension_semantics<parallel>], iteration_bounds = array<i64: 2>, scalar_prefetch = 0 : i64, scratch_operands = 0 : i64, tpu.core_type = #tpu.core_type<tc>, window_params = [{transform_indices = @transform_0, window_bounds = array<i64: 1, 8, 32>}, {transform_indices = @transform_1, window_bounds = array<i64: 1, 8, 32>}, {transform_indices = @transform_2, window_bounds = array<i64: 1, 8, 32>}, {pipeline_mode = #tpu.pipeline_mode<synchronous>, transform_indices = @transform_3, window_bounds = array<i64: 32, 32>}, {pipeline_mode = #tpu.pipeline_mode<synchronous>, transform_indices = @transform_4, window_bounds = array<i64: 1, 32>}, {pipeline_mode = #tpu.pipeline_mode<synchronous>, transform_indices = @transform_5, window_bounds = array<i64: 32, 32>}, {pipeline_mode = #tpu.pipeline_mode<synchronous>, transform_indices = @transform_6, window_bounds = array<i64: 1, 32>}, {pipeline_mode = #tpu.pipeline_mode<synchronous>, transform_indices = @transform_7, window_bounds = array<i64: 32, 32>}, {pipeline_mode = #tpu.pipeline_mode<synchronous>, transform_indices = @transform_8, window_bounds = array<i64: 1, 32>}, {pipeline_mode = #tpu.pipeline_mode<synchronous>, transform_indices = @transform_9, window_bounds = array<i64: 32, 32>}, {pipeline_mode = #tpu.pipeline_mode<synchronous>, transform_indices = @transform_10, window_bounds = array<i64: 1, 32>}, {transform_indices = @transform_11, window_bounds = array<i64: 1, 8, 32>}]} {
    %c0 = arith.constant 0 : index
    %c0_0 = arith.constant 0 : index
    %c0_1 = arith.constant 0 : index
    %0 = vector.load %arg1[%c0, %c0_0, %c0_1] : memref<1x8x32xf32, #tpu.memory_space<vmem>>, vector<1x8x32xf32>
    %1 = vector.shape_cast %0 : vector<1x8x32xf32> to vector<8x32xf32>
    %c0_2 = arith.constant 0 : index
    %c0_3 = arith.constant 0 : index
    %c0_4 = arith.constant 0 : index
    %2 = vector.load %arg2[%c0_2, %c0_3, %c0_4] : memref<1x8x32xf32, #tpu.memory_space<vmem>>, vector<1x8x32xf32>
    %3 = vector.shape_cast %2 : vector<1x8x32xf32> to vector<8x32xf32>
    %c0_5 = arith.constant 0 : index
    %c0_6 = arith.constant 0 : index
    %c0_7 = arith.constant 0 : index
    %4 = vector.load %arg3[%c0_5, %c0_6, %c0_7] : memref<1x8x32xf32, #tpu.memory_space<vmem>>, vector<1x8x32xf32>
    %5 = vector.shape_cast %4 : vector<1x8x32xf32> to vector<8x32xf32>
    %c0_8 = arith.constant 0 : index
    %c0_9 = arith.constant 0 : index
    %6 = vector.load %arg4[%c0_8, %c0_9] : memref<32x32xf32, #tpu.memory_space<vmem>>, vector<32x32xf32>
    %cst = arith.constant dense<0.000000e+00> : vector<8x32xf32>
    %7 = tpu.matmul %1, %6, %cst {dimension_numbers = #tpu.dot_dimension_numbers<[1], [0], [0], [1], [0, 0, 1, 1], [], []>} : vector<8x32xf32>, vector<32x32xf32>, vector<8x32xf32> -> vector<8x32xf32>
    %c0_10 = arith.constant 0 : index
    %c0_11 = arith.constant 0 : index
    %8 = vector.load %arg5[%c0_10, %c0_11] : memref<1x32xf32, #tpu.memory_space<vmem>>, vector<1x32xf32>
    %9 = vector.broadcast %8 : vector<1x32xf32> to vector<8x32xf32>
    %10 = arith.addf %7, %9 : vector<8x32xf32>
    %c0_12 = arith.constant 0 : index
    %c0_13 = arith.constant 0 : index
    %11 = vector.load %arg6[%c0_12, %c0_13] : memref<32x32xf32, #tpu.memory_space<vmem>>, vector<32x32xf32>
    %cst_14 = arith.constant dense<0.000000e+00> : vector<8x32xf32>
    %12 = tpu.matmul %3, %11, %cst_14 {dimension_numbers = #tpu.dot_dimension_numbers<[1], [0], [0], [1], [0, 0, 1, 1], [], []>} : vector<8x32xf32>, vector<32x32xf32>, vector<8x32xf32> -> vector<8x32xf32>
    %c0_15 = arith.constant 0 : index
    %c0_16 = arith.constant 0 : index
    %13 = vector.load %arg7[%c0_15, %c0_16] : memref<1x32xf32, #tpu.memory_space<vmem>>, vector<1x32xf32>
    %14 = vector.broadcast %13 : vector<1x32xf32> to vector<8x32xf32>
    %15 = arith.addf %12, %14 : vector<8x32xf32>
    %c0_17 = arith.constant 0 : index
    %c0_18 = arith.constant 0 : index
    %16 = vector.load %arg8[%c0_17, %c0_18] : memref<32x32xf32, #tpu.memory_space<vmem>>, vector<32x32xf32>
    %cst_19 = arith.constant dense<0.000000e+00> : vector<8x32xf32>
    %17 = tpu.matmul %5, %16, %cst_19 {dimension_numbers = #tpu.dot_dimension_numbers<[1], [0], [0], [1], [0, 0, 1, 1], [], []>} : vector<8x32xf32>, vector<32x32xf32>, vector<8x32xf32> -> vector<8x32xf32>
    %c0_20 = arith.constant 0 : index
    %c0_21 = arith.constant 0 : index
    %18 = vector.load %arg9[%c0_20, %c0_21] : memref<1x32xf32, #tpu.memory_space<vmem>>, vector<1x32xf32>
    %19 = vector.broadcast %18 : vector<1x32xf32> to vector<8x32xf32>
    %20 = arith.addf %17, %19 : vector<8x32xf32>
    %21 = vector.extract_strided_slice %10 {offsets = [0, 0], sizes = [8, 8], strides = [1, 1]} : vector<8x32xf32> to vector<8x8xf32>
    %22 = vector.extract_strided_slice %15 {offsets = [0, 0], sizes = [8, 8], strides = [1, 1]} : vector<8x32xf32> to vector<8x8xf32>
    %23 = vector.extract_strided_slice %20 {offsets = [0, 0], sizes = [8, 8], strides = [1, 1]} : vector<8x32xf32> to vector<8x8xf32>
    %cst_22 = arith.constant dense<0.000000e+00> : vector<8x8xf32>
    %24 = tpu.matmul %21, %22, %cst_22 {dimension_numbers = #tpu.dot_dimension_numbers<[1], [1], [0], [0], [0, 0, 1, 0], [], []>} : vector<8x8xf32>, vector<8x8xf32>, vector<8x8xf32> -> vector<8x8xf32>
    %cst_23 = arith.constant 0.353553385 : f32
    %25 = vector.broadcast %cst_23 : f32 to vector<8x8xf32>
    %26 = arith.mulf %24, %25 : vector<8x8xf32>
    %cst_24 = arith.constant dense<0xFF800000> : vector<8xf32>
    %27 = vector.multi_reduction <maximumf>, %26, %cst_24 [1] : vector<8x8xf32> to vector<8xf32>
    %28 = vector.shape_cast %27 : vector<8xf32> to vector<8x1xf32>
    %29 = vector.broadcast %28 : vector<8x1xf32> to vector<8x8xf32>
    %30 = arith.subf %26, %29 : vector<8x8xf32>
    %31 = math.exp %30 : vector<8x8xf32>
    %cst_25 = arith.constant dense<0.000000e+00> : vector<8xf32>
    %32 = vector.multi_reduction <add>, %31, %cst_25 [1] : vector<8x8xf32> to vector<8xf32>
    %33 = vector.shape_cast %32 : vector<8xf32> to vector<8x1xf32>
    %34 = tpu.reciprocal %33 {approx = true} : vector<8x1xf32> -> vector<8x1xf32>
    %35 = vector.broadcast %34 : vector<8x1xf32> to vector<8x8xf32>
    %36 = arith.mulf %31, %35 : vector<8x8xf32>
    %cst_26 = arith.constant dense<0.000000e+00> : vector<8x8xf32>
    %37 = tpu.matmul %36, %23, %cst_26 {dimension_numbers = #tpu.dot_dimension_numbers<[1], [0], [0], [1], [0, 0, 1, 1], [], []>} : vector<8x8xf32>, vector<8x8xf32>, vector<8x8xf32> -> vector<8x8xf32>
    %38 = vector.extract_strided_slice %10 {offsets = [0, 8], sizes = [8, 8], strides = [1, 1]} : vector<8x32xf32> to vector<8x8xf32>
    %39 = vector.extract_strided_slice %15 {offsets = [0, 8], sizes = [8, 8], strides = [1, 1]} : vector<8x32xf32> to vector<8x8xf32>
    %40 = vector.extract_strided_slice %20 {offsets = [0, 8], sizes = [8, 8], strides = [1, 1]} : vector<8x32xf32> to vector<8x8xf32>
    %cst_27 = arith.constant dense<0.000000e+00> : vector<8x8xf32>
    %41 = tpu.matmul %38, %39, %cst_27 {dimension_numbers = #tpu.dot_dimension_numbers<[1], [1], [0], [0], [0, 0, 1, 0], [], []>} : vector<8x8xf32>, vector<8x8xf32>, vector<8x8xf32> -> vector<8x8xf32>
    %cst_28 = arith.constant 0.353553385 : f32
    %42 = vector.broadcast %cst_28 : f32 to vector<8x8xf32>
    %43 = arith.mulf %41, %42 : vector<8x8xf32>
    %cst_29 = arith.constant dense<0xFF800000> : vector<8xf32>
    %44 = vector.multi_reduction <maximumf>, %43, %cst_29 [1] : vector<8x8xf32> to vector<8xf32>
    %45 = vector.shape_cast %44 : vector<8xf32> to vector<8x1xf32>
    %46 = vector.broadcast %45 : vector<8x1xf32> to vector<8x8xf32>
    %47 = arith.subf %43, %46 : vector<8x8xf32>
    %48 = math.exp %47 : vector<8x8xf32>
    %cst_30 = arith.constant dense<0.000000e+00> : vector<8xf32>
    %49 = vector.multi_reduction <add>, %48, %cst_30 [1] : vector<8x8xf32> to vector<8xf32>
    %50 = vector.shape_cast %49 : vector<8xf32> to vector<8x1xf32>
    %51 = tpu.reciprocal %50 {approx = true} : vector<8x1xf32> -> vector<8x1xf32>
    %52 = vector.broadcast %51 : vector<8x1xf32> to vector<8x8xf32>
    %53 = arith.mulf %48, %52 : vector<8x8xf32>
    %cst_31 = arith.constant dense<0.000000e+00> : vector<8x8xf32>
    %54 = tpu.matmul %53, %40, %cst_31 {dimension_numbers = #tpu.dot_dimension_numbers<[1], [0], [0], [1], [0, 0, 1, 1], [], []>} : vector<8x8xf32>, vector<8x8xf32>, vector<8x8xf32> -> vector<8x8xf32>
    %55 = vector.extract_strided_slice %10 {offsets = [0, 16], sizes = [8, 8], strides = [1, 1]} : vector<8x32xf32> to vector<8x8xf32>
    %56 = vector.extract_strided_slice %15 {offsets = [0, 16], sizes = [8, 8], strides = [1, 1]} : vector<8x32xf32> to vector<8x8xf32>
    %57 = vector.extract_strided_slice %20 {offsets = [0, 16], sizes = [8, 8], strides = [1, 1]} : vector<8x32xf32> to vector<8x8xf32>
    %cst_32 = arith.constant dense<0.000000e+00> : vector<8x8xf32>
    %58 = tpu.matmul %55, %56, %cst_32 {dimension_numbers = #tpu.dot_dimension_numbers<[1], [1], [0], [0], [0, 0, 1, 0], [], []>} : vector<8x8xf32>, vector<8x8xf32>, vector<8x8xf32> -> vector<8x8xf32>
    %cst_33 = arith.constant 0.353553385 : f32
    %59 = vector.broadcast %cst_33 : f32 to vector<8x8xf32>
    %60 = arith.mulf %58, %59 : vector<8x8xf32>
    %cst_34 = arith.constant dense<0xFF800000> : vector<8xf32>
    %61 = vector.multi_reduction <maximumf>, %60, %cst_34 [1] : vector<8x8xf32> to vector<8xf32>
    %62 = vector.shape_cast %61 : vector<8xf32> to vector<8x1xf32>
    %63 = vector.broadcast %62 : vector<8x1xf32> to vector<8x8xf32>
    %64 = arith.subf %60, %63 : vector<8x8xf32>
    %65 = math.exp %64 : vector<8x8xf32>
    %cst_35 = arith.constant dense<0.000000e+00> : vector<8xf32>
    %66 = vector.multi_reduction <add>, %65, %cst_35 [1] : vector<8x8xf32> to vector<8xf32>
    %67 = vector.shape_cast %66 : vector<8xf32> to vector<8x1xf32>
    %68 = tpu.reciprocal %67 {approx = true} : vector<8x1xf32> -> vector<8x1xf32>
    %69 = vector.broadcast %68 : vector<8x1xf32> to vector<8x8xf32>
    %70 = arith.mulf %65, %69 : vector<8x8xf32>
    %cst_36 = arith.constant dense<0.000000e+00> : vector<8x8xf32>
    %71 = tpu.matmul %70, %57, %cst_36 {dimension_numbers = #tpu.dot_dimension_numbers<[1], [0], [0], [1], [0, 0, 1, 1], [], []>} : vector<8x8xf32>, vector<8x8xf32>, vector<8x8xf32> -> vector<8x8xf32>
    %72 = vector.extract_strided_slice %10 {offsets = [0, 24], sizes = [8, 8], strides = [1, 1]} : vector<8x32xf32> to vector<8x8xf32>
    %73 = vector.extract_strided_slice %15 {offsets = [0, 24], sizes = [8, 8], strides = [1, 1]} : vector<8x32xf32> to vector<8x8xf32>
    %74 = vector.extract_strided_slice %20 {offsets = [0, 24], sizes = [8, 8], strides = [1, 1]} : vector<8x32xf32> to vector<8x8xf32>
    %cst_37 = arith.constant dense<0.000000e+00> : vector<8x8xf32>
    %75 = tpu.matmul %72, %73, %cst_37 {dimension_numbers = #tpu.dot_dimension_numbers<[1], [1], [0], [0], [0, 0, 1, 0], [], []>} : vector<8x8xf32>, vector<8x8xf32>, vector<8x8xf32> -> vector<8x8xf32>
    %cst_38 = arith.constant 0.353553385 : f32
    %76 = vector.broadcast %cst_38 : f32 to vector<8x8xf32>
    %77 = arith.mulf %75, %76 : vector<8x8xf32>
    %cst_39 = arith.constant dense<0xFF800000> : vector<8xf32>
    %78 = vector.multi_reduction <maximumf>, %77, %cst_39 [1] : vector<8x8xf32> to vector<8xf32>
    %79 = vector.shape_cast %78 : vector<8xf32> to vector<8x1xf32>
    %80 = vector.broadcast %79 : vector<8x1xf32> to vector<8x8xf32>
    %81 = arith.subf %77, %80 : vector<8x8xf32>
    %82 = math.exp %81 : vector<8x8xf32>
    %cst_40 = arith.constant dense<0.000000e+00> : vector<8xf32>
    %83 = vector.multi_reduction <add>, %82, %cst_40 [1] : vector<8x8xf32> to vector<8xf32>
    %84 = vector.shape_cast %83 : vector<8xf32> to vector<8x1xf32>
    %85 = tpu.reciprocal %84 {approx = true} : vector<8x1xf32> -> vector<8x1xf32>
    %86 = vector.broadcast %85 : vector<8x1xf32> to vector<8x8xf32>
    %87 = arith.mulf %82, %86 : vector<8x8xf32>
    %cst_41 = arith.constant dense<0.000000e+00> : vector<8x8xf32>
    %88 = tpu.matmul %87, %74, %cst_41 {dimension_numbers = #tpu.dot_dimension_numbers<[1], [0], [0], [1], [0, 0, 1, 1], [], []>} : vector<8x8xf32>, vector<8x8xf32>, vector<8x8xf32> -> vector<8x8xf32>
    %89 = tpu.concatenate %37, %54, %71, %88 in 1 : vector<8x8xf32>, vector<8x8xf32>, vector<8x8xf32>, vector<8x8xf32> -> vector<8x32xf32>
    %c0_42 = arith.constant 0 : index
    %c0_43 = arith.constant 0 : index
    %90 = vector.load %arg10[%c0_42, %c0_43] : memref<32x32xf32, #tpu.memory_space<vmem>>, vector<32x32xf32>
    %cst_44 = arith.constant dense<0.000000e+00> : vector<8x32xf32>
    %91 = tpu.matmul %89, %90, %cst_44 {dimension_numbers = #tpu.dot_dimension_numbers<[1], [0], [0], [1], [0, 0, 1, 1], [], []>} : vector<8x32xf32>, vector<32x32xf32>, vector<8x32xf32> -> vector<8x32xf32>
    %c0_45 = arith.constant 0 : index
    %c0_46 = arith.constant 0 : index
    %92 = vector.load %arg11[%c0_45, %c0_46] : memref<1x32xf32, #tpu.memory_space<vmem>>, vector<1x32xf32>
    %93 = vector.broadcast %92 : vector<1x32xf32> to vector<8x32xf32>
    %94 = arith.addf %91, %93 : vector<8x32xf32>
    %c0_47 = arith.constant 0 : index
    %c0_48 = arith.constant 0 : index
    %c0_49 = arith.constant 0 : index
    %95 = vector.load %arg12[%c0_47, %c0_48, %c0_49] : memref<1x8x32xf32, #tpu.memory_space<vmem>>, vector<1x8x32xf32>
    %96 = vector.shape_cast %95 : vector<1x8x32xf32> to vector<8x32xf32>
    %97 = vector.shape_cast %94 : vector<8x32xf32> to vector<1x8x32xf32>
    tpu.vector_store %arg12[%c0_47, %c0_48, %c0_49], %97 {strides = array<i32>} : memref<1x8x32xf32, #tpu.memory_space<vmem>>, vector<1x8x32xf32>,
    return
  }
  func.func @transform_0(%arg0: i32) -> (i32, i32, i32) {
    %c0_i32 = arith.constant 0 : i32
    %c0_i32_0 = arith.constant 0 : i32
    %c0_i32_1 = arith.constant 0 : i32
    return %arg0, %c0_i32, %c0_i32_0 : i32, i32, i32
  }
  func.func @transform_1(%arg0: i32) -> (i32, i32, i32) {
    %c0_i32 = arith.constant 0 : i32
    %c0_i32_0 = arith.constant 0 : i32
    %c0_i32_1 = arith.constant 0 : i32
    return %arg0, %c0_i32, %c0_i32_0 : i32, i32, i32
  }
  func.func @transform_2(%arg0: i32) -> (i32, i32, i32) {
    %c0_i32 = arith.constant 0 : i32
    %c0_i32_0 = arith.constant 0 : i32
    %c0_i32_1 = arith.constant 0 : i32
    return %arg0, %c0_i32, %c0_i32_0 : i32, i32, i32
  }
  func.func @transform_3(%arg0: i32) -> (i32, i32) {
    %c0_i32 = arith.constant 0 : i32
    %c0_i32_0 = arith.constant 0 : i32
    %c0_i32_1 = arith.constant 0 : i32
    return %c0_i32, %c0_i32_0 : i32, i32
  }
  func.func @transform_4(%arg0: i32) -> (i32, i32) {
    %c0_i32 = arith.constant 0 : i32
    %c0_i32_0 = arith.constant 0 : i32
    %c0_i32_1 = arith.constant 0 : i32
    return %c0_i32, %c0_i32_0 : i32, i32
  }
  func.func @transform_5(%arg0: i32) -> (i32, i32) {
    %c0_i32 = arith.constant 0 : i32
    %c0_i32_0 = arith.constant 0 : i32
    %c0_i32_1 = arith.constant 0 : i32
    return %c0_i32, %c0_i32_0 : i32, i32
  }
  func.func @transform_6(%arg0: i32) -> (i32, i32) {
    %c0_i32 = arith.constant 0 : i32
    %c0_i32_0 = arith.constant 0 : i32
    %c0_i32_1 = arith.constant 0 : i32
    return %c0_i32, %c0_i32_0 : i32, i32
  }
  func.func @transform_7(%arg0: i32) -> (i32, i32) {
    %c0_i32 = arith.constant 0 : i32
    %c0_i32_0 = arith.constant 0 : i32
    %c0_i32_1 = arith.constant 0 : i32
    return %c0_i32, %c0_i32_0 : i32, i32
  }
  func.func @transform_8(%arg0: i32) -> (i32, i32) {
    %c0_i32 = arith.constant 0 : i32
    %c0_i32_0 = arith.constant 0 : i32
    %c0_i32_1 = arith.constant 0 : i32
    return %c0_i32, %c0_i32_0 : i32, i32
  }
  func.func @transform_9(%arg0: i32) -> (i32, i32) {
    %c0_i32 = arith.constant 0 : i32
    %c0_i32_0 = arith.constant 0 : i32
    %c0_i32_1 = arith.constant 0 : i32
    return %c0_i32, %c0_i32_0 : i32, i32
  }
  func.func @transform_10(%arg0: i32) -> (i32, i32) {
    %c0_i32 = arith.constant 0 : i32
    %c0_i32_0 = arith.constant 0 : i32
    %c0_i32_1 = arith.constant 0 : i32
    return %c0_i32, %c0_i32_0 : i32, i32
  }
  func.func @transform_11(%arg0: i32) -> (i32, i32, i32) {
    %c0_i32 = arith.constant 0 : i32
    %c0_i32_0 = arith.constant 0 : i32
    %c0_i32_1 = arith.constant 0 : i32
    return %arg0, %c0_i32, %c0_i32_0 : i32, i32, i32
  }
}

</mosaic_0001>

<llo_original>
// kernel: tpu_custom_call.1
$region0: #{tpu_custom_call.1}
  #allocation0 [shape = 'u32[]', space=smem, size = 0x4, offset = 0x4, fixed_abs, tag = 'smem constant byte address 0x4 - core index']
  #allocation1 [shape = 'u32[144,128]{1,0:T(1,128)}', space=vmem, size = 0x12000, scoped, tag = 'internal scratch']
  %s0 = inlined_call_operand.hbm [shape: f32[2,8,32], index: 0, kind: input, shape index: {}]
  %s1 = inlined_call_operand.hbm [shape: f32[2,8,32], index: 1, kind: input, shape index: {}]
  %s2 = inlined_call_operand.hbm [shape: f32[2,8,32], index: 2, kind: input, shape index: {}]
  %s3 = inlined_call_operand.hbm [shape: f32[32,32], index: 3, kind: input, shape index: {}]
  %s4 = inlined_call_operand.vmem [shape: f32[1,32], index: 4, kind: input, shape index: {}]
  %s5 = inlined_call_operand.hbm [shape: f32[32,32], index: 5, kind: input, shape index: {}]
  %s6 = inlined_call_operand.vmem [shape: f32[1,32], index: 6, kind: input, shape index: {}]
  %s7 = inlined_call_operand.hbm [shape: f32[32,32], index: 7, kind: input, shape index: {}]
  %s8 = inlined_call_operand.hbm [shape: f32[1,32], index: 8, kind: input, shape index: {}]
  %s9 = inlined_call_operand.vmem [shape: f32[32,32], index: 9, kind: input, shape index: {}]
  %s10 = inlined_call_operand.vmem [shape: f32[1,32], index: 10, kind: input, shape index: {}]
  %s11 = inlined_call_operand.hbm [shape: f32[2,8,32], index: 11, kind: output, shape index: {}]
  %s12 = sld [smem:[#allocation0]]
  $region105: #{tpu_custom_call.1} parent=0
    _
  %s14 = ssub.s32 1, %s12
  %s15 = scalar_select 0, %s14, %s12
  $region1: #{tpu_custom_call.1} parent=0
    #allocation2 [shape = 'u8[8192]{0}', space=vmem, size = 0x2000, scoped, tag = 'input window, operand 0']
    #allocation3 [shape = 's32[2]{0}', space=sflag, size = 0x8, scoped, tag = 'scoped memory for tpu_custom_call.1']
    #allocation4 [shape = 's32[2]{0}', space=sflag, size = 0x8, scoped, tag = 'scoped memory for tpu_custom_call.1']
    #allocation5 [shape = 'u8[8192]{0}', space=vmem, size = 0x2000, scoped, tag = 'input window, operand 1']
    #allocation6 [shape = 's32[2]{0}', space=sflag, size = 0x8, scoped, tag = 'scoped memory for tpu_custom_call.1']
    #allocation7 [shape = 'u8[8192]{0}', space=vmem, size = 0x2000, scoped, tag = 'input window, operand 2']
    #allocation8 [shape = 'u8[16384]{0}', space=vmem, size = 0x4000, scoped, tag = 'input window, operand 3, single buffered']
    #allocation9 [shape = 's32[1]{0}', space=sflag, size = 0x4, scoped, tag = 'scoped memory for tpu_custom_call.1']
    #allocation10 [shape = 'u8[16384]{0}', space=vmem, size = 0x4000, scoped, tag = 'input window, operand 5, single buffered']
    #allocation11 [shape = 'u8[16384]{0}', space=vmem, size = 0x4000, scoped, tag = 'input window, operand 7, single buffered']
    #allocation12 [shape = 's32[1]{0}', space=sflag, size = 0x4, scoped, tag = 'scoped memory for tpu_custom_call.1']
    #allocation13 [shape = 'u8[512]{0}', space=vmem, size = 0x400, scoped, tag = 'input window, operand 8, single buffered']
    #allocation14 [shape = 'u8[8192]{0}', space=vmem, size = 0x2000, scoped, tag = 'output window, operand 0']
    %16 = vsyncpa [#allocation3], 0
    %s17 = scalar_lea.sflag [#allocation3], 1
    %18 = vsyncpa %s17, 0
    %19 = vsyncpa [#allocation6], 0
    %s20 = scalar_lea.sflag [#allocation6], 1
    %21 = vsyncpa %s20, 0
    %22 = vsyncpa [#allocation9], 0
    %23 = vsyncpa [#allocation12], 0
    %24 = vsyncpa [#allocation4], 0
    %s25 = scalar_lea.sflag [#allocation4], 1
    %26 = vsyncpa %s25, 0
    loop: start=0, step=1, limit=4
    $region2: #{tpu_custom_call.1} parent=1 // loop_pre_header
      _
    $region3: #{tpu_custom_call.1} parent=1 // loop_header
      %s28 = sphi 0, %s32
      %p29 = scmp.ge.s32.totalorder %s28, 4
      %s38 = sphi 0, %s40
      %s41 = sphi 0, %s38
      %s42 = sphi 0, %s41
      %s58 = sphi 0, %s42
      %s64 = sphi 0, %s66
      %s67 = sphi 0, %s64
      %s68 = sphi 0, %s67
      %s84 = sphi 0, %s68
      %s90 = sphi 0, %s92
      %s93 = sphi 0, %s90
      %s94 = sphi 0, %s93
      %s110 = sphi 0, %s94
      %s114 = sphi 0, %s114
      %s116 = sphi 0, %s114
      %s117 = sphi 0, %s116
      %s131 = sphi 0, %s117
      %s135 = sphi 0, %s135
      %s137 = sphi 0, %s135
      %s138 = sphi 0, %s137
      %s152 = sphi 0, %s138
      %s156 = sphi 0, %s156
      %s158 = sphi 0, %s156
      %s159 = sphi 0, %s158
      %s173 = sphi 0, %s159
      %s177 = sphi 0, %s177
      %s179 = sphi 0, %s177
      %s180 = sphi 0, %s179
      %s194 = sphi 0, %s180
      %s198 = sphi 0, %s198
      %s200 = sphi 0, %s198
      %s201 = sphi 0, %s200
      %s215 = sphi 0, %s201
      %s219 = sphi 0, %s219
      %s221 = sphi 0, %s219
      %s222 = sphi 0, %s221
      %s236 = sphi 0, %s222
      %s240 = sphi 0, %s240
      %s242 = sphi 0, %s240
      %s243 = sphi 0, %s242
      %s257 = sphi 0, %s243
      %s261 = sphi 0, %s261
      %s263 = sphi 0, %s261
      %s264 = sphi 0, %s263
      %s278 = sphi 0, %s264
      %s284 = sphi 0, %s286
      %s287 = sphi 0, %s284
      %s288 = sphi 0, %s287
      %s304 = sphi 0, %s288
    $region4: #{tpu_custom_call.1} parent=1 // loop_header_branch
      %31 = sbr.rel (%p29) target = $region8
    $region5: #{tpu_custom_call.1} parent=1 // loop_body
      %s33 = ssub.s32 %s28, 1
      %s34 = ssub.s32 %s28, 2
      %s35 = sadd.s32 %s28, 1
      %s36 = ssub.s32 %s28, %s35
      %p37 = scmp.eq.s32.totalorder %s36, 0
      %s39 = sadd.s32 %s38, 1
      %s40 = scalar_select %p37, %s38, %s39
      %p43 = pneg %p37
      %p44 = scmp.eq.s32.totalorder %s28, 1
      %p45 = por %p43, %p44
      %p46 = scmp.ne.s32.totalorder %s38, %s41
      %p47 = scmp.eq.s32.totalorder %s28, 0
      %p48 = por %p46, %p47
      %p49 = scmp.ne.s32.totalorder %s38, %s41
      %p50 = scmp.eq.s32.totalorder %s33, 1
      %p51 = por %p49, %p50
      %p52 = scmp.ne.s32.totalorder %s41, %s42
      %p53 = scmp.eq.s32.totalorder %s33, 0
      %p54 = por %p52, %p53
      %p55 = scmp.ne.s32.totalorder %s41, %s42
      %p56 = scmp.eq.s32.totalorder %s34, 1
      %p57 = por %p55, %p56
      %p59 = scmp.ne.s32.totalorder %s42, %s58
      %p60 = scmp.eq.s32.totalorder %s34, 0
      %p61 = por %p59, %p60
      %s62 = ssub.s32 %s28, %s35
      %p63 = scmp.eq.s32.totalorder %s62, 0
      %s65 = sadd.s32 %s64, 1
      %s66 = scalar_select %p63, %s64, %s65
      %p69 = pneg %p63
      %p70 = scmp.eq.s32.totalorder %s28, 1
      %p71 = por %p69, %p70
      %p72 = scmp.ne.s32.totalorder %s64, %s67
      %p73 = scmp.eq.s32.totalorder %s28, 0
      %p74 = por %p72, %p73
      %p75 = scmp.ne.s32.totalorder %s64, %s67
      %p76 = scmp.eq.s32.totalorder %s33, 1
      %p77 = por %p75, %p76
      %p78 = scmp.ne.s32.totalorder %s67, %s68
      %p79 = scmp.eq.s32.totalorder %s33, 0
      %p80 = por %p78, %p79
      %p81 = scmp.ne.s32.totalorder %s67, %s68
      %p82 = scmp.eq.s32.totalorder %s34, 1
      %p83 = por %p81, %p82
      %p85 = scmp.ne.s32.totalorder %s68, %s84
      %p86 = scmp.eq.s32.totalorder %s34, 0
      %p87 = por %p85, %p86
      %s88 = ssub.s32 %s28, %s35
      %p89 = scmp.eq.s32.totalorder %s88, 0
      %s91 = sadd.s32 %s90, 1
      %s92 = scalar_select %p89, %s90, %s91
      %p95 = pneg %p89
      %p96 = scmp.eq.s32.totalorder %s28, 1
      %p97 = por %p95, %p96
      %p98 = scmp.ne.s32.totalorder %s90, %s93
      %p99 = scmp.eq.s32.totalorder %s28, 0
      %p100 = por %p98, %p99
      %p101 = scmp.ne.s32.totalorder %s90, %s93
      %p102 = scmp.eq.s32.totalorder %s33, 1
      %p103 = por %p101, %p102
      %p104 = scmp.ne.s32.totalorder %s93, %s94
      %p105 = scmp.eq.s32.totalorder %s33, 0
      %p106 = por %p104, %p105
      %p107 = scmp.ne.s32.totalorder %s93, %s94
      %p108 = scmp.eq.s32.totalorder %s34, 1
      %p109 = por %p107, %p108
      %p111 = scmp.ne.s32.totalorder %s94, %s110
      %p112 = scmp.eq.s32.totalorder %s34, 0
      %p113 = por %p111, %p112
      %s115 = sadd.s32 %s114, 1
      %p118 = scmp.eq.s32.totalorder %s28, 1
      %p119 = scmp.ne.s32.totalorder %s114, %s116
      %p120 = scmp.eq.s32.totalorder %s28, 0
      %p121 = por %p119, %p120
      %p122 = scmp.ne.s32.totalorder %s114, %s116
      %p123 = scmp.eq.s32.totalorder %s33, 1
      %p124 = por %p122, %p123
      %p125 = scmp.ne.s32.totalorder %s116, %s117
      %p126 = scmp.eq.s32.totalorder %s33, 0
      %p127 = por %p125, %p126
      %p128 = scmp.ne.s32.totalorder %s116, %s117
      %p129 = scmp.eq.s32.totalorder %s34, 1
      %p130 = por %p128, %p129
      %p132 = scmp.ne.s32.totalorder %s117, %s131
      %p133 = scmp.eq.s32.totalorder %s34, 0
      %p134 = por %p132, %p133
      %s136 = sadd.s32 %s135, 1
      %p139 = scmp.eq.s32.totalorder %s28, 1
      %p140 = scmp.ne.s32.totalorder %s135, %s137
      %p141 = scmp.eq.s32.totalorder %s28, 0
      %p142 = por %p140, %p141
      %p143 = scmp.ne.s32.totalorder %s135, %s137
      %p144 = scmp.eq.s32.totalorder %s33, 1
      %p145 = por %p143, %p144
      %p146 = scmp.ne.s32.totalorder %s137, %s138
      %p147 = scmp.eq.s32.totalorder %s33, 0
      %p148 = por %p146, %p147
      %p149 = scmp.ne.s32.totalorder %s137, %s138
      %p150 = scmp.eq.s32.totalorder %s34, 1
      %p151 = por %p149, %p150
      %p153 = scmp.ne.s32.totalorder %s138, %s152
      %p154 = scmp.eq.s32.totalorder %s34, 0
      %p155 = por %p153, %p154
      %s157 = sadd.s32 %s156, 1
      %p160 = scmp.eq.s32.totalorder %s28, 1
      %p161 = scmp.ne.s32.totalorder %s156, %s158
      %p162 = scmp.eq.s32.totalorder %s28, 0
      %p163 = por %p161, %p162
      %p164 = scmp.ne.s32.totalorder %s156, %s158
      %p165 = scmp.eq.s32.totalorder %s33, 1
      %p166 = por %p164, %p165
      %p167 = scmp.ne.s32.totalorder %s158, %s159
      %p168 = scmp.eq.s32.totalorder %s33, 0
      %p169 = por %p167, %p168
      %p170 = scmp.ne.s32.totalorder %s158, %s159
      %p171 = scmp.eq.s32.totalorder %s34, 1
      %p172 = por %p170, %p171
      %p174 = scmp.ne.s32.totalorder %s159, %s173
      %p175 = scmp.eq.s32.totalorder %s34, 0
      %p176 = por %p174, %p175
      %s178 = sadd.s32 %s177, 1
      %p181 = scmp.eq.s32.totalorder %s28, 1
      %p182 = scmp.ne.s32.totalorder %s177, %s179
      %p183 = scmp.eq.s32.totalorder %s28, 0
      %p184 = por %p182, %p183
      %p185 = scmp.ne.s32.totalorder %s177, %s179
      %p186 = scmp.eq.s32.totalorder %s33, 1
      %p187 = por %p185, %p186
      %p188 = scmp.ne.s32.totalorder %s179, %s180
      %p189 = scmp.eq.s32.totalorder %s33, 0
      %p190 = por %p188, %p189
      %p191 = scmp.ne.s32.totalorder %s179, %s180
      %p192 = scmp.eq.s32.totalorder %s34, 1
      %p193 = por %p191, %p192
      %p195 = scmp.ne.s32.totalorder %s180, %s194
      %p196 = scmp.eq.s32.totalorder %s34, 0
      %p197 = por %p195, %p196
      %s199 = sadd.s32 %s198, 1
      %p202 = scmp.eq.s32.totalorder %s28, 1
      %p203 = scmp.ne.s32.totalorder %s198, %s200
      %p204 = scmp.eq.s32.totalorder %s28, 0
      %p205 = por %p203, %p204
      %p206 = scmp.ne.s32.totalorder %s198, %s200
      %p207 = scmp.eq.s32.totalorder %s33, 1
      %p208 = por %p206, %p207
      %p209 = scmp.ne.s32.totalorder %s200, %s201
      %p210 = scmp.eq.s32.totalorder %s33, 0
      %p211 = por %p209, %p210
      %p212 = scmp.ne.s32.totalorder %s200, %s201
      %p213 = scmp.eq.s32.totalorder %s34, 1
      %p214 = por %p212, %p213
      %p216 = scmp.ne.s32.totalorder %s201, %s215
      %p217 = scmp.eq.s32.totalorder %s34, 0
      %p218 = por %p216, %p217
      %s220 = sadd.s32 %s219, 1
      %p223 = scmp.eq.s32.totalorder %s28, 1
      %p224 = scmp.ne.s32.totalorder %s219, %s221
      %p225 = scmp.eq.s32.totalorder %s28, 0
      %p226 = por %p224, %p225
      %p227 = scmp.ne.s32.totalorder %s219, %s221
      %p228 = scmp.eq.s32.totalorder %s33, 1
      %p229 = por %p227, %p228
      %p230 = scmp.ne.s32.totalorder %s221, %s222
      %p231 = scmp.eq.s32.totalorder %s33, 0
      %p232 = por %p230, %p231
      %p233 = scmp.ne.s32.totalorder %s221, %s222
      %p234 = scmp.eq.s32.totalorder %s34, 1
      %p235 = por %p233, %p234
      %p237 = scmp.ne.s32.totalorder %s222, %s236
      %p238 = scmp.eq.s32.totalorder %s34, 0
      %p239 = por %p237, %p238
      %s241 = sadd.s32 %s240, 1
      %p244 = scmp.eq.s32.totalorder %s28, 1
      %p245 = scmp.ne.s32.totalorder %s240, %s242
      %p246 = scmp.eq.s32.totalorder %s28, 0
      %p247 = por %p245, %p246
      %p248 = scmp.ne.s32.totalorder %s240, %s242
      %p249 = scmp.eq.s32.totalorder %s33, 1
      %p250 = por %p248, %p249
      %p251 = scmp.ne.s32.totalorder %s242, %s243
      %p252 = scmp.eq.s32.totalorder %s33, 0
      %p253 = por %p251, %p252
      %p254 = scmp.ne.s32.totalorder %s242, %s243
      %p255 = scmp.eq.s32.totalorder %s34, 1
      %p256 = por %p254, %p255
      %p258 = scmp.ne.s32.totalorder %s243, %s257
      %p259 = scmp.eq.s32.totalorder %s34, 0
      %p260 = por %p258, %p259
      %s262 = sadd.s32 %s261, 1
      %p265 = scmp.eq.s32.totalorder %s28, 1
      %p266 = scmp.ne.s32.totalorder %s261, %s263
      %p267 = scmp.eq.s32.totalorder %s28, 0
      %p268 = por %p266, %p267
      %p269 = scmp.ne.s32.totalorder %s261, %s263
      %p270 = scmp.eq.s32.totalorder %s33, 1
      %p271 = por %p269, %p270
      %p272 = scmp.ne.s32.totalorder %s263, %s264
      %p273 = scmp.eq.s32.totalorder %s33, 0
      %p274 = por %p272, %p273
      %p275 = scmp.ne.s32.totalorder %s263, %s264
      %p276 = scmp.eq.s32.totalorder %s34, 1
      %p277 = por %p275, %p276
      %p279 = scmp.ne.s32.totalorder %s264, %s278
      %p280 = scmp.eq.s32.totalorder %s34, 0
      %p281 = por %p279, %p280
      %s282 = ssub.s32 %s28, %s35
      %p283 = scmp.eq.s32.totalorder %s282, 0
      %s285 = sadd.s32 %s284, 1
      %s286 = scalar_select %p283, %s284, %s285
      %p289 = pneg %p283
      %p290 = scmp.eq.s32.totalorder %s28, 1
      %p291 = por %p289, %p290
      %p292 = scmp.ne.s32.totalorder %s284, %s287
      %p293 = scmp.eq.s32.totalorder %s28, 0
      %p294 = por %p292, %p293
      %p295 = scmp.ne.s32.totalorder %s284, %s287
      %p296 = scmp.eq.s32.totalorder %s33, 1
      %p297 = por %p295, %p296
      %p298 = scmp.ne.s32.totalorder %s287, %s288
      %p299 = scmp.eq.s32.totalorder %s33, 0
      %p300 = por %p298, %p299
      %p301 = scmp.ne.s32.totalorder %s287, %s288
      %p302 = scmp.eq.s32.totalorder %s34, 1
      %p303 = por %p301, %p302
      %p305 = scmp.ne.s32.totalorder %s288, %s304
      %p306 = scmp.eq.s32.totalorder %s34, 0
      %p307 = por %p305, %p306
      %p308 = scmp.le.s32.totalorder 1, %s28
      %p309 = scmp.lt.s32.totalorder %s28, 3
      %p310 = pnand %p308, %p309
      %p311 = pneg %p310
      // Predicated region
      $region9: #{tpu_custom_call.1} parent=5 // pred_check
        _
      $region10: #{tpu_custom_call.1} parent=5 // pred_check_branch
        %313 = sbr.rel (%p310) target = $region12
      $region11: #{tpu_custom_call.1} parent=5 // pred_region
        %s314 = ssub.s32 %s28, 1
        // Predicated region
        $region13: #{tpu_custom_call.1} parent=11 // pred_check
          %p315 = pneg %p127
        $region14: #{tpu_custom_call.1} parent=11 // pred_check_branch
          %317 = sbr.rel (%p315) target = $region16
        $region15: #{tpu_custom_call.1} parent=11 // pred_region
          %s319 = ssub.s32 512, 512
          %320 = vsyncadd [#allocation9], %s319
          %s321 = sshll.u32 [#allocation8], 4
          %s322 = int_to_ptr.vmem [resolvable:$true] %s321
          %327 = dma.hbm_to_vmem [thread:$0]  %s3, 512, %s322, [#allocation9], 128, 128, 8
        $region16: #{tpu_custom_call.1} parent=11 // pred_fallthru
          _
        // Predicated region
        $region17: #{tpu_custom_call.1} parent=11 // pred_check
          %p328 = pneg %p148
        $region18: #{tpu_custom_call.1} parent=11 // pred_check_branch
          %330 = sbr.rel (%p328) target = $region20
        $region19: #{tpu_custom_call.1} parent=11 // pred_region
          _
        $region20: #{tpu_custom_call.1} parent=11 // pred_fallthru
          _
        // Predicated region
        $region21: #{tpu_custom_call.1} parent=11 // pred_check
          %p331 = pneg %p169
        $region22: #{tpu_custom_call.1} parent=11 // pred_check_branch
          %333 = sbr.rel (%p331) target = $region24
        $region23: #{tpu_custom_call.1} parent=11 // pred_region
          %s335 = ssub.s32 512, 512
          %336 = vsyncadd [#allocation9], %s335
          %s337 = sshll.u32 [#allocation10], 4
          %s338 = int_to_ptr.vmem [resolvable:$true] %s337
          %343 = dma.hbm_to_vmem [thread:$0]  %s5, 512, %s338, [#allocation9], 128, 128, 8
        $region24: #{tpu_custom_call.1} parent=11 // pred_fallthru
          _
        // Predicated region
        $region25: #{tpu_custom_call.1} parent=11 // pred_check
          %p344 = pneg %p190
        $region26: #{tpu_custom_call.1} parent=11 // pred_check_branch
          %346 = sbr.rel (%p344) target = $region28
        $region27: #{tpu_custom_call.1} parent=11 // pred_region
          _
        $region28: #{tpu_custom_call.1} parent=11 // pred_fallthru
          _
        // Predicated region
        $region29: #{tpu_custom_call.1} parent=11 // pred_check
          %p347 = pneg %p211
        $region30: #{tpu_custom_call.1} parent=11 // pred_check_branch
          %349 = sbr.rel (%p347) target = $region32
        $region31: #{tpu_custom_call.1} parent=11 // pred_region
          %s351 = ssub.s32 512, 512
          %352 = vsyncadd [#allocation12], %s351
          %s353 = sshll.u32 [#allocation11], 4
          %s354 = int_to_ptr.vmem [resolvable:$true] %s353
          %359 = dma.hbm_to_vmem [thread:$0]  %s7, 512, %s354, [#allocation12], 128, 128, 8
        $region32: #{tpu_custom_call.1} parent=11 // pred_fallthru
          _
        // Predicated region
        $region33: #{tpu_custom_call.1} parent=11 // pred_check
          %p360 = pneg %p232
        $region34: #{tpu_custom_call.1} parent=11 // pred_check_branch
          %362 = sbr.rel (%p360) target = $region36
        $region35: #{tpu_custom_call.1} parent=11 // pred_region
          %s364 = ssub.s32 16, 16
          %365 = vsyncadd [#allocation12], %s364
          %s367 = sshll.u32 [#allocation13], 4
          %s368 = int_to_ptr.vmem [resolvable:$true] %s367
          %370 = dma.hbm_to_vmem [thread:$0]  %s8, 16, %s368, [#allocation12]
        $region36: #{tpu_custom_call.1} parent=11 // pred_fallthru
          _
        // Predicated region
        $region37: #{tpu_custom_call.1} parent=11 // pred_check
          %p371 = pneg %p253
        $region38: #{tpu_custom_call.1} parent=11 // pred_check_branch
          %373 = sbr.rel (%p371) target = $region40
        $region39: #{tpu_custom_call.1} parent=11 // pred_region
          _
        $region40: #{tpu_custom_call.1} parent=11 // pred_fallthru
          _
        // Predicated region
        $region41: #{tpu_custom_call.1} parent=11 // pred_check
          %p374 = pneg %p274
        $region42: #{tpu_custom_call.1} parent=11 // pred_check_branch
          %376 = sbr.rel (%p374) target = $region44
        $region43: #{tpu_custom_call.1} parent=11 // pred_region
          _
        $region44: #{tpu_custom_call.1} parent=11 // pred_fallthru
          _
      $region12: #{tpu_custom_call.1} parent=5 // pred_fallthru
        _
      %p377 = scmp.lt.s32.totalorder %s28, 2
      // Predicated region
      $region45: #{tpu_custom_call.1} parent=5 // pred_check
        %p378 = pneg %p377
      $region46: #{tpu_custom_call.1} parent=5 // pred_check_branch
        %380 = sbr.rel (%p378) target = $region48
      $region47: #{tpu_custom_call.1} parent=5 // pred_region
        // Predicated region
        $region49: #{tpu_custom_call.1} parent=47 // pred_check
          %p381 = pneg %p48
        $region50: #{tpu_custom_call.1} parent=47 // pred_check_branch
          %383 = sbr.rel (%p381) target = $region52
        $region51: #{tpu_custom_call.1} parent=47 // pred_region
          %s384 = sand.u32 %s38, 1
          %s385 = scalar_lea.sflag [#allocation3], %s384
          %s386 = sand.u32 %s38, 1
          %s387 = smul.addr %s386, 8
          %s388 = scalar_lea.vmem [#allocation2], %s387
          %s390 = ssub.s32 128, 128
          %391 = vsyncadd %s385, %s390
          %s392 = smul.addr %s28, 128
          %s393 = scalar_lea.hbm %s0, %s392
          %s395 = sshll.u32 %s388, 4
          %s396 = int_to_ptr.vmem [resolvable:$true] %s395
          %398 = dma.hbm_to_vmem [thread:$0]  %s393, 128, %s396, %s385
        $region52: #{tpu_custom_call.1} parent=47 // pred_fallthru
          _
        // Predicated region
        $region53: #{tpu_custom_call.1} parent=47 // pred_check
          %p399 = pneg %p74
        $region54: #{tpu_custom_call.1} parent=47 // pred_check_branch
          %401 = sbr.rel (%p399) target = $region56
        $region55: #{tpu_custom_call.1} parent=47 // pred_region
          %s402 = sand.u32 %s28, 1
          %s403 = scalar_lea.sflag [#allocation6], %s402
          %s404 = sand.u32 %s64, 1
          %s405 = smul.addr %s404, 8
          %s406 = scalar_lea.vmem [#allocation5], %s405
          %s408 = ssub.s32 128, 128
          %409 = vsyncadd %s403, %s408
          %s410 = smul.addr %s28, 128
          %s411 = scalar_lea.hbm %s1, %s410
          %s413 = sshll.u32 %s406, 4
          %s414 = int_to_ptr.vmem [resolvable:$true] %s413
          %416 = dma.hbm_to_vmem [thread:$0]  %s411, 128, %s414, %s403
        $region56: #{tpu_custom_call.1} parent=47 // pred_fallthru
          _
        // Predicated region
        $region57: #{tpu_custom_call.1} parent=47 // pred_check
          %p417 = pneg %p100
        $region58: #{tpu_custom_call.1} parent=47 // pred_check_branch
          %419 = sbr.rel (%p417) target = $region60
        $region59: #{tpu_custom_call.1} parent=47 // pred_region
          %s420 = sand.u32 %s28, 1
          %s421 = scalar_lea.sflag [#allocation6], %s420
          %s422 = sand.u32 %s90, 1
          %s423 = smul.addr %s422, 8
          %s424 = scalar_lea.vmem [#allocation7], %s423
          %s426 = ssub.s32 128, 128
          %427 = vsyncadd %s421, %s426
          %s428 = smul.addr %s28, 128
          %s429 = scalar_lea.hbm %s2, %s428
          %s431 = sshll.u32 %s424, 4
          %s432 = int_to_ptr.vmem [resolvable:$true] %s431
          %434 = dma.hbm_to_vmem [thread:$0]  %s429, 128, %s432, %s421
        $region60: #{tpu_custom_call.1} parent=47 // pred_fallthru
          _
      $region48: #{tpu_custom_call.1} parent=5 // pred_fallthru
        _
      %p435 = scmp.le.s32.totalorder 1, %s28
      %p436 = scmp.lt.s32.totalorder %s28, 3
      %p437 = pnand %p435, %p436
      %p438 = pneg %p437
      // Predicated region
      $region61: #{tpu_custom_call.1} parent=5 // pred_check
        _
      $region62: #{tpu_custom_call.1} parent=5 // pred_check_branch
        %440 = sbr.rel (%p437) target = $region64
      $region63: #{tpu_custom_call.1} parent=5 // pred_region
        %s441 = ssub.s32 %s28, 1
        %s442 = sand.u32 %s41, 1
        %s443 = scalar_lea.sflag [#allocation3], %s442
        %s444 = sand.u32 %s41, 1
        %s445 = smul.addr %s444, 8
        %s446 = scalar_lea.vmem [#allocation2], %s445
        // Predicated region
        $region65: #{tpu_custom_call.1} parent=63 // pred_check
          %p447 = pneg %p54
        $region66: #{tpu_custom_call.1} parent=63 // pred_check_branch
          %449 = sbr.rel (%p447) target = $region68
        $region67: #{tpu_custom_call.1} parent=63 // pred_region
          %450 = dma.done %s443, 128
        $region68: #{tpu_custom_call.1} parent=63 // pred_fallthru
          _
        %s451 = sand.u32 %s33, 1
        %s452 = scalar_lea.sflag [#allocation6], %s451
        %s453 = sand.u32 %s67, 1
        %s454 = smul.addr %s453, 8
        %s455 = scalar_lea.vmem [#allocation5], %s454
        // Predicated region
        $region69: #{tpu_custom_call.1} parent=63 // pred_check
          %p456 = pneg %p80
        $region70: #{tpu_custom_call.1} parent=63 // pred_check_branch
          %458 = sbr.rel (%p456) target = $region72
        $region71: #{tpu_custom_call.1} parent=63 // pred_region
          %459 = dma.done %s452, 128
        $region72: #{tpu_custom_call.1} parent=63 // pred_fallthru
          _
        %s460 = sand.u32 %s33, 1
        %s461 = scalar_lea.sflag [#allocation6], %s460
        %s462 = sand.u32 %s93, 1
        %s463 = smul.addr %s462, 8
        %s464 = scalar_lea.vmem [#allocation7], %s463
        // Predicated region
        $region73: #{tpu_custom_call.1} parent=63 // pred_check
          %p465 = pneg %p106
        $region74: #{tpu_custom_call.1} parent=63 // pred_check_branch
          %467 = sbr.rel (%p465) target = $region76
        $region75: #{tpu_custom_call.1} parent=63 // pred_region
          %468 = dma.done %s461, 128
        $region76: #{tpu_custom_call.1} parent=63 // pred_fallthru
          _
        // Predicated region
        $region77: #{tpu_custom_call.1} parent=63 // pred_check
          %p469 = pneg %p127
        $region78: #{tpu_custom_call.1} parent=63 // pred_check_branch
          %471 = sbr.rel (%p469) target = $region80
        $region79: #{tpu_custom_call.1} parent=63 // pred_region
          %472 = dma.done [#allocation9], 512
        $region80: #{tpu_custom_call.1} parent=63 // pred_fallthru
          _
        // Predicated region
        $region81: #{tpu_custom_call.1} parent=63 // pred_check
          %p473 = pneg %p169
        $region82: #{tpu_custom_call.1} parent=63 // pred_check_branch
          %475 = sbr.rel (%p473) target = $region84
        $region83: #{tpu_custom_call.1} parent=63 // pred_region
          %476 = dma.done [#allocation9], 512
        $region84: #{tpu_custom_call.1} parent=63 // pred_fallthru
          _
        // Predicated region
        $region85: #{tpu_custom_call.1} parent=63 // pred_check
          %p477 = pneg %p211
        $region86: #{tpu_custom_call.1} parent=63 // pred_check_branch
          %479 = sbr.rel (%p477) target = $region88
        $region87: #{tpu_custom_call.1} parent=63 // pred_region
          %480 = dma.done [#allocation12], 512
        $region88: #{tpu_custom_call.1} parent=63 // pred_fallthru
          _
        // Predicated region
        $region89: #{tpu_custom_call.1} parent=63 // pred_check
          %p481 = pneg %p232
        $region90: #{tpu_custom_call.1} parent=63 // pred_check_branch
          %483 = sbr.rel (%p481) target = $region92
        $region91: #{tpu_custom_call.1} parent=63 // pred_region
          %484 = dma.done [#allocation12], 16
        $region92: #{tpu_custom_call.1} parent=63 // pred_fallthru
          _
        %s485 = sand.u32 %s41, 1
        %s486 = scalar_lea.sflag [#allocation3], %s485
        %s487 = sand.u32 %s41, 1
        %s488 = smul.addr %s487, 8
        %s489 = scalar_lea.vmem [#allocation2], %s488
        %p490 = pneg %p54
        %p491 = pneg %p51
        %s492 = sand.u32 %s33, 1
        %s493 = scalar_lea.sflag [#allocation6], %s492
        %s494 = sand.u32 %s67, 1
        %s495 = smul.addr %s494, 8
        %s496 = scalar_lea.vmem [#allocation5], %s495
        %p497 = pneg %p80
        %p498 = pneg %p77
        %s499 = sand.u32 %s33, 1
        %s500 = scalar_lea.sflag [#allocation6], %s499
        %s501 = sand.u32 %s93, 1
        %s502 = smul.addr %s501, 8
        %s503 = scalar_lea.vmem [#allocation7], %s502
        %p504 = pneg %p106
        %p505 = pneg %p103
        %p506 = pneg %p127
        %p507 = pneg %p124
        %p508 = pneg %p148
        %p509 = pneg %p145
        %p510 = pneg %p169
        %p511 = pneg %p166
        %p512 = pneg %p190
        %p513 = pneg %p187
        %p514 = pneg %p211
        %p515 = pneg %p208
        %p516 = pneg %p232
        %p517 = pneg %p229
        %p518 = pneg %p253
        %p519 = pneg %p250
        %p520 = pneg %p274
        %p521 = pneg %p271
        %p522 = pneg %p300
        %p523 = pneg %p297
        %s524 = sand.u32 %s287, 1
        %s525 = scalar_lea.sflag [#allocation4], %s524
        %s526 = sand.u32 %s287, 1
        %s527 = smul.addr %s526, 8
        %s528 = scalar_lea.vmem [#allocation14], %s527
        %v529 = vld [vmem:[%s446] sm:$0xff]
        %v530 = vld [vmem:[%s455] sm:$0xff]
        %v531 = vld [vmem:[%s464] sm:$0xff]
        %v532 = vld [vmem:[#allocation8] sm:$0xff]
        %v533 = vld [vmem:[#allocation8 + $0x8] sm:$0xff]
        %v534 = vld [vmem:[#allocation8 + $0x10] sm:$0xff]
        %v535 = vld [vmem:[#allocation8 + $0x18] sm:$0xff]
        %v536 = vld [vmem:[%s4] sm:$0x1]
        %v538 = vlaneseq
        %v539 = vshrl.u32 %v538, 7
        %v540 = vsub.s32 0, %v539
        %v541 = vrot.slane %v536, %v540
        %vm543 = vcmask 261120
        %v545 = vsel %vm543, %v529, 0
        %547 = vmatprep.subr.mxu0 0.0
        %548 = vmatpush1.msra.mxu0 %v532
        %549 = vmatprep.subr.mxu0 0.0
        %550 = vmatpush1.msra.mxu0 %v533
        %551 = vmatprep.subr.mxu0 0.0
        %552 = vmatpush1.msra.mxu0 %v534
        %553 = vmatprep.subr.mxu0 0.0
        %554 = vmatpush1.msra.mxu0 %v535
        %555 = vmatprep.subr.mxu0 0.0
        %556 = vmatpush1.msra.mxu0 0.0
        %557 = vmatprep.subr.mxu0 0.0
        %558 = vmatpush1.msra.mxu0 0.0
        %559 = vmatprep.subr.mxu0 0.0
        %560 = vmatpush1.msra.mxu0 0.0
        %561 = vmatprep.subr.mxu0 0.0
        %562 = vmatpush1.msra.mxu0 0.0
        %563 = vmatprep.subr.mxu0 0.0
        %564 = vmatpush1.msra.mxu0 0.0
        %565 = vmatprep.subr.mxu0 0.0
        %566 = vmatpush1.msra.mxu0 0.0
        %567 = vmatprep.subr.mxu0 0.0
        %568 = vmatpush1.msra.mxu0 0.0
        %569 = vmatprep.subr.mxu0 0.0
        %570 = vmatpush1.msra.mxu0 0.0
        %571 = vmatprep.subr.mxu0 0.0
        %572 = vmatpush1.msra.mxu0 0.0
        %573 = vmatprep.subr.mxu0 0.0
        %574 = vmatpush1.msra.mxu0 0.0
        %575 = vmatprep.subr.mxu0 0.0
        %576 = vmatpush1.msra.mxu0 0.0
        %577 = vmatprep.subr.mxu0 0.0
        %578 = vmatpush1.msra.mxu0 0.0
        %579 = vmatprep.subr.mxu0 0.0
        %580 = vmatpush1.msra.mxu0 0.0
        %581 = vmatprep.subr.mxu0 0.0
        %582 = vmatpush1.msra.mxu0 0.0
        %583 = vmatprep.subr.mxu0 0.0
        %584 = vmatpush1.msra.mxu0 0.0
        %585 = vmatprep.subr.mxu0 0.0
        %586 = vmatpush1.msra.mxu0 0.0
        %587 = vmatprep.subr.mxu0 0.0
        %588 = vmatpush1.msra.mxu0 0.0
        %589 = vmatprep.subr.mxu0 0.0
        %590 = vmatpush1.msra.mxu0 0.0
        %591 = vmatprep.subr.mxu0 0.0
        %592 = vmatpush1.msra.mxu0 0.0
        %593 = vmatprep.subr.mxu0 0.0
        %594 = vmatpush1.msra.mxu0 0.0
        %595 = vmatprep.subr.mxu0 0.0
        %596 = vmatpush1.msra.mxu0 0.0
        %597 = vmatprep.subr.mxu0 0.0
        %598 = vmatpush1.msra.mxu0 0.0
        %599 = vmatprep.subr.mxu0 0.0
        %600 = vmatpush1.msra.mxu0 0.0
        %601 = vmatprep.subr.mxu0 0.0
        %602 = vmatpush1.msra.mxu0 0.0
        %603 = vmatprep.subr.mxu0 0.0
        %604 = vmatpush1.msra.mxu0 0.0
        %605 = vmatprep.subr.mxu0 0.0
        %606 = vmatpush1.msra.mxu0 0.0
        %607 = vmatprep.subr.mxu0 0.0
        %608 = vmatpush1.msra.mxu0 0.0
        %609 = vmatprep.subr.mxu0 0.0
        %610 = vmatpush1.msra.mxu0 0.0
        %611 = vmatprep.mubr.f32.mxu0 0.0
        %612 = vmatmul.mubr.f32.gmra.mrb[0].mxu0 %v545
        %v613 = vpop.f32.mrb[0].mxu0
        %v614 = vadd.f32 %v541, %v613
        %v615 = vpop.f32.mrb[0].mxu0
        %616 = vdwg.mxu0
        %v617 = vld [vmem:[#allocation10] sm:$0xff]
        %v618 = vld [vmem:[#allocation10 + $0x8] sm:$0xff]
        %v619 = vld [vmem:[#allocation10 + $0x10] sm:$0xff]
        %v620 = vld [vmem:[#allocation10 + $0x18] sm:$0xff]
        %v621 = vld [vmem:[%s6] sm:$0x1]
        %v623 = vlaneseq
        %v624 = vshrl.u32 %v623, 7
        %v625 = vsub.s32 0, %v624
        %v626 = vrot.slane %v621, %v625
        %v629 = vsel %vm543, %v530, 0
        %631 = vmatprep.subr.mxu0 0.0
        %632 = vmatpush1.msra.mxu0 %v617
        %633 = vmatprep.subr.mxu0 0.0
        %634 = vmatpush1.msra.mxu0 %v618
        %635 = vmatprep.subr.mxu0 0.0
        %636 = vmatpush1.msra.mxu0 %v619
        %637 = vmatprep.subr.mxu0 0.0
        %638 = vmatpush1.msra.mxu0 %v620
        %639 = vmatprep.subr.mxu0 0.0
        %640 = vmatpush1.msra.mxu0 0.0
        %641 = vmatprep.subr.mxu0 0.0
        %642 = vmatpush1.msra.mxu0 0.0
        %643 = vmatprep.subr.mxu0 0.0
        %644 = vmatpush1.msra.mxu0 0.0
        %645 = vmatprep.subr.mxu0 0.0
        %646 = vmatpush1.msra.mxu0 0.0
        %647 = vmatprep.subr.mxu0 0.0
        %648 = vmatpush1.msra.mxu0 0.0
        %649 = vmatprep.subr.mxu0 0.0
        %650 = vmatpush1.msra.mxu0 0.0
        %651 = vmatprep.subr.mxu0 0.0
        %652 = vmatpush1.msra.mxu0 0.0
        %653 = vmatprep.subr.mxu0 0.0
        %654 = vmatpush1.msra.mxu0 0.0
        %655 = vmatprep.subr.mxu0 0.0
        %656 = vmatpush1.msra.mxu0 0.0
        %657 = vmatprep.subr.mxu0 0.0
        %658 = vmatpush1.msra.mxu0 0.0
        %659 = vmatprep.subr.mxu0 0.0
        %660 = vmatpush1.msra.mxu0 0.0
        %661 = vmatprep.subr.mxu0 0.0
        %662 = vmatpush1.msra.mxu0 0.0
        %663 = vmatprep.subr.mxu0 0.0
        %664 = vmatpush1.msra.mxu0 0.0
        %665 = vmatprep.subr.mxu0 0.0
        %666 = vmatpush1.msra.mxu0 0.0
        %667 = vmatprep.subr.mxu0 0.0
        %668 = vmatpush1.msra.mxu0 0.0
        %669 = vmatprep.subr.mxu0 0.0
        %670 = vmatpush1.msra.mxu0 0.0
        %671 = vmatprep.subr.mxu0 0.0
        %672 = vmatpush1.msra.mxu0 0.0
        %673 = vmatprep.subr.mxu0 0.0
        %674 = vmatpush1.msra.mxu0 0.0
        %675 = vmatprep.subr.mxu0 0.0
        %676 = vmatpush1.msra.mxu0 0.0
        %677 = vmatprep.subr.mxu0 0.0
        %678 = vmatpush1.msra.mxu0 0.0
        %679 = vmatprep.subr.mxu0 0.0
        %680 = vmatpush1.msra.mxu0 0.0
        %681 = vmatprep.subr.mxu0 0.0
        %682 = vmatpush1.msra.mxu0 0.0
        %683 = vmatprep.subr.mxu0 0.0
        %684 = vmatpush1.msra.mxu0 0.0
        %685 = vmatprep.subr.mxu0 0.0
        %686 = vmatpush1.msra.mxu0 0.0
        %687 = vmatprep.subr.mxu0 0.0
        %688 = vmatpush1.msra.mxu0 0.0
        %689 = vmatprep.subr.mxu0 0.0
        %690 = vmatpush1.msra.mxu0 0.0
        %691 = vmatprep.subr.mxu0 0.0
        %692 = vmatpush1.msra.mxu0 0.0
        %693 = vmatprep.subr.mxu0 0.0
        %694 = vmatpush1.msra.mxu0 0.0
        %695 = vmatprep.mubr.f32.mxu0 0.0
        %696 = vmatmul.mubr.f32.gmra.mrb[0].mxu0 %v629
        %v697 = vpop.f32.mrb[0].mxu0
        %v698 = vadd.f32 %v626, %v697
        %v699 = vpop.f32.mrb[0].mxu0
        %700 = vdwg.mxu0
        %v701 = vld [vmem:[#allocation11] sm:$0xff]
        %v702 = vld [vmem:[#allocation11 + $0x8] sm:$0xff]
        %v703 = vld [vmem:[#allocation11 + $0x10] sm:$0xff]
        %v704 = vld [vmem:[#allocation11 + $0x18] sm:$0xff]
        %v705 = vld [vmem:[#allocation13] sm:$0x1]
        %v707 = vlaneseq
        %v708 = vshrl.u32 %v707, 7
        %v709 = vsub.s32 0, %v708
        %v710 = vrot.slane %v705, %v709
        %v713 = vsel %vm543, %v531, 0
        %715 = vmatprep.subr.mxu0 0.0
        %716 = vmatpush1.msra.mxu0 %v701
        %717 = vmatprep.subr.mxu0 0.0
        %718 = vmatpush1.msra.mxu0 %v702
        %719 = vmatprep.subr.mxu0 0.0
        %720 = vmatpush1.msra.mxu0 %v703
        %721 = vmatprep.subr.mxu0 0.0
        %722 = vmatpush1.msra.mxu0 %v704
        %723 = vmatprep.subr.mxu0 0.0
        %724 = vmatpush1.msra.mxu0 0.0
        %725 = vmatprep.subr.mxu0 0.0
        %726 = vmatpush1.msra.mxu0 0.0
        %727 = vmatprep.subr.mxu0 0.0
        %728 = vmatpush1.msra.mxu0 0.0
        %729 = vmatprep.subr.mxu0 0.0
        %730 = vmatpush1.msra.mxu0 0.0
        %731 = vmatprep.subr.mxu0 0.0
        %732 = vmatpush1.msra.mxu0 0.0
        %733 = vmatprep.subr.mxu0 0.0
        %734 = vmatpush1.msra.mxu0 0.0
        %735 = vmatprep.subr.mxu0 0.0
        %736 = vmatpush1.msra.mxu0 0.0
        %737 = vmatprep.subr.mxu0 0.0
        %738 = vmatpush1.msra.mxu0 0.0
        %739 = vmatprep.subr.mxu0 0.0
        %740 = vmatpush1.msra.mxu0 0.0
        %741 = vmatprep.subr.mxu0 0.0
        %742 = vmatpush1.msra.mxu0 0.0
        %743 = vmatprep.subr.mxu0 0.0
        %744 = vmatpush1.msra.mxu0 0.0
        %745 = vmatprep.subr.mxu0 0.0
        %746 = vmatpush1.msra.mxu0 0.0
        %747 = vmatprep.subr.mxu0 0.0
        %748 = vmatpush1.msra.mxu0 0.0
        %749 = vmatprep.subr.mxu0 0.0
        %750 = vmatpush1.msra.mxu0 0.0
        %751 = vmatprep.subr.mxu0 0.0
        %752 = vmatpush1.msra.mxu0 0.0
        %753 = vmatprep.subr.mxu0 0.0
        %754 = vmatpush1.msra.mxu0 0.0
        %755 = vmatprep.subr.mxu0 0.0
        %756 = vmatpush1.msra.mxu0 0.0
        %757 = vmatprep.subr.mxu0 0.0
        %758 = vmatpush1.msra.mxu0 0.0
        %759 = vmatprep.subr.mxu0 0.0
        %760 = vmatpush1.msra.mxu0 0.0
        %761 = vmatprep.subr.mxu0 0.0
        %762 = vmatpush1.msra.mxu0 0.0
        %763 = vmatprep.subr.mxu0 0.0
        %764 = vmatpush1.msra.mxu0 0.0
        %765 = vmatprep.subr.mxu0 0.0
        %766 = vmatpush1.msra.mxu0 0.0
        %767 = vmatprep.subr.mxu0 0.0
        %768 = vmatpush1.msra.mxu0 0.0
        %769 = vmatprep.subr.mxu0 0.0
        %770 = vmatpush1.msra.mxu0 0.0
        %771 = vmatprep.subr.mxu0 0.0
        %772 = vmatpush1.msra.mxu0 0.0
        %773 = vmatprep.subr.mxu0 0.0
        %774 = vmatpush1.msra.mxu0 0.0
        %775 = vmatprep.subr.mxu0 0.0
        %776 = vmatpush1.msra.mxu0 0.0
        %777 = vmatprep.subr.mxu0 0.0
        %778 = vmatpush1.msra.mxu0 0.0
        %779 = vmatprep.mubr.f32.mxu0 0.0
        %780 = vmatmul.mubr.f32.gmra.mrb[0].mxu0 %v713
        %v781 = vpop.f32.mrb[0].mxu0
        %v782 = vadd.f32 %v710, %v781
        %v783 = vpop.f32.mrb[0].mxu0
        %784 = vdwg.mxu0
        %vm785 = vcmask 64512
        %v787 = vsel %vm785, %v614, 0
        %v790 = vsel %vm785, %v698, 0
        %792 = vmatprep.subr.mxu0 0.0
        %793 = vmatpush1.xpose.msra.mxu0 %v790
        %794 = vmatprep.subr.mxu0 0.0
        %795 = vmatpush1.xpose.msra.mxu0 0.0
        %796 = vmatprep.subr.mxu0 0.0
        %797 = vmatpush1.xpose.msra.mxu0 0.0
        %798 = vmatprep.subr.mxu0 0.0
        %799 = vmatpush1.xpose.msra.mxu0 0.0
        %800 = vmatprep.subr.mxu0 0.0
        %801 = vmatpush1.xpose.msra.mxu0 0.0
        %802 = vmatprep.subr.mxu0 0.0
        %803 = vmatpush1.xpose.msra.mxu0 0.0
        %804 = vmatprep.subr.mxu0 0.0
        %805 = vmatpush1.xpose.msra.mxu0 0.0
        %806 = vmatprep.subr.mxu0 0.0
        %807 = vmatpush1.xpose.msra.mxu0 0.0
        %808 = vmatprep.subr.mxu0 0.0
        %809 = vmatpush1.xpose.msra.mxu0 0.0
        %810 = vmatprep.subr.mxu0 0.0
        %811 = vmatpush1.xpose.msra.mxu0 0.0
        %812 = vmatprep.subr.mxu0 0.0
        %813 = vmatpush1.xpose.msra.mxu0 0.0
        %814 = vmatprep.subr.mxu0 0.0
        %815 = vmatpush1.xpose.msra.mxu0 0.0
        %816 = vmatprep.subr.mxu0 0.0
        %817 = vmatpush1.xpose.msra.mxu0 0.0
        %818 = vmatprep.subr.mxu0 0.0
        %819 = vmatpush1.xpose.msra.mxu0 0.0
        %820 = vmatprep.subr.mxu0 0.0
        %821 = vmatpush1.xpose.msra.mxu0 0.0
        %822 = vmatprep.subr.mxu0 0.0
        %823 = vmatpush1.xpose.msra.mxu0 0.0
        %824 = vmatprep.subr.mxu0 0.0
        %825 = vmatpush1.xpose.msra.mxu0 0.0
        %826 = vmatprep.subr.mxu0 0.0
        %827 = vmatpush1.xpose.msra.mxu0 0.0
        %828 = vmatprep.subr.mxu0 0.0
        %829 = vmatpush1.xpose.msra.mxu0 0.0
        %830 = vmatprep.subr.mxu0 0.0
        %831 = vmatpush1.xpose.msra.mxu0 0.0
        %832 = vmatprep.subr.mxu0 0.0
        %833 = vmatpush1.xpose.msra.mxu0 0.0
        %834 = vmatprep.subr.mxu0 0.0
        %835 = vmatpush1.xpose.msra.mxu0 0.0
        %836 = vmatprep.subr.mxu0 0.0
        %837 = vmatpush1.xpose.msra.mxu0 0.0
        %838 = vmatprep.subr.mxu0 0.0
        %839 = vmatpush1.xpose.msra.mxu0 0.0
        %840 = vmatprep.subr.mxu0 0.0
        %841 = vmatpush1.xpose.msra.mxu0 0.0
        %842 = vmatprep.subr.mxu0 0.0
        %843 = vmatpush1.xpose.msra.mxu0 0.0
        %844 = vmatprep.subr.mxu0 0.0
        %845 = vmatpush1.xpose.msra.mxu0 0.0
        %846 = vmatprep.subr.mxu0 0.0
        %847 = vmatpush1.xpose.msra.mxu0 0.0
        %848 = vmatprep.subr.mxu0 0.0
        %849 = vmatpush1.xpose.msra.mxu0 0.0
        %850 = vmatprep.subr.mxu0 0.0
        %851 = vmatpush1.xpose.msra.mxu0 0.0
        %852 = vmatprep.subr.mxu0 0.0
        %853 = vmatpush1.xpose.msra.mxu0 0.0
        %854 = vmatprep.subr.mxu0 0.0
        %855 = vmatpush1.xpose.msra.mxu0 0.0
        %856 = vmatprep.mubr.f32.mxu0 0.0
        %857 = vmatmul.mubr.f32.gmra.mrb[0].mxu0 %v787
        %v858 = vpop.f32.mrb[0].mxu0
        %v859 = vadd.f32 0.0, %v858
        %v860 = vpop.f32.mrb[0].mxu0
        %861 = vdwg.mxu0
        %v862 = vmul.f32 %v859, 0.35355338
        %v863 = vsel %vm785, %v862, -inf
        %864 = vmax.xlane.f32.xlu0 %v863
        %v865 = vpop.xlane.xlu0 %864
        %v866 = vsub.f32 %v862, %v865
        %v867 = vmul.f32 %v866, 1.442695
        %v868 = vpow.pop %v867
        %v869 = vsel %vm785, %v868, 0.0
        %870 = vadd.xlane.f32.xlu0 %v869
        %v871 = vpop.xlane.xlu0 %870
        %v872 = vrcp.pop %v871
        %v873 = vmul.f32 %v868, %v872
        %v875 = vsel %vm785, %v873, 0
        %877 = vmatprep.subr.mxu0 0.0
        %878 = vmatpush1.msra.mxu0 %v782
        %879 = vmatprep.subr.mxu0 0.0
        %880 = vmatpush1.msra.mxu0 0.0
        %881 = vmatprep.subr.mxu0 0.0
        %882 = vmatpush1.msra.mxu0 0.0
        %883 = vmatprep.subr.mxu0 0.0
        %884 = vmatpush1.msra.mxu0 0.0
        %885 = vmatprep.subr.mxu0 0.0
        %886 = vmatpush1.msra.mxu0 0.0
        %887 = vmatprep.subr.mxu0 0.0
        %888 = vmatpush1.msra.mxu0 0.0
        %889 = vmatprep.subr.mxu0 0.0
        %890 = vmatpush1.msra.mxu0 0.0
        %891 = vmatprep.subr.mxu0 0.0
        %892 = vmatpush1.msra.mxu0 0.0
        %893 = vmatprep.subr.mxu0 0.0
        %894 = vmatpush1.msra.mxu0 0.0
        %895 = vmatprep.subr.mxu0 0.0
        %896 = vmatpush1.msra.mxu0 0.0
        %897 = vmatprep.subr.mxu0 0.0
        %898 = vmatpush1.msra.mxu0 0.0
        %899 = vmatprep.subr.mxu0 0.0
        %900 = vmatpush1.msra.mxu0 0.0
        %901 = vmatprep.subr.mxu0 0.0
        %902 = vmatpush1.msra.mxu0 0.0
        %903 = vmatprep.subr.mxu0 0.0
        %904 = vmatpush1.msra.mxu0 0.0
        %905 = vmatprep.subr.mxu0 0.0
        %906 = vmatpush1.msra.mxu0 0.0
        %907 = vmatprep.subr.mxu0 0.0
        %908 = vmatpush1.msra.mxu0 0.0
        %909 = vmatprep.subr.mxu0 0.0
        %910 = vmatpush1.msra.mxu0 0.0
        %911 = vmatprep.subr.mxu0 0.0
        %912 = vmatpush1.msra.mxu0 0.0
        %913 = vmatprep.subr.mxu0 0.0
        %914 = vmatpush1.msra.mxu0 0.0
        %915 = vmatprep.subr.mxu0 0.0
        %916 = vmatpush1.msra.mxu0 0.0
        %917 = vmatprep.subr.mxu0 0.0
        %918 = vmatpush1.msra.mxu0 0.0
        %919 = vmatprep.subr.mxu0 0.0
        %920 = vmatpush1.msra.mxu0 0.0
        %921 = vmatprep.subr.mxu0 0.0
        %922 = vmatpush1.msra.mxu0 0.0
        %923 = vmatprep.subr.mxu0 0.0
        %924 = vmatpush1.msra.mxu0 0.0
        %925 = vmatprep.subr.mxu0 0.0
        %926 = vmatpush1.msra.mxu0 0.0
        %927 = vmatprep.subr.mxu0 0.0
        %928 = vmatpush1.msra.mxu0 0.0
        %929 = vmatprep.subr.mxu0 0.0
        %930 = vmatpush1.msra.mxu0 0.0
        %931 = vmatprep.subr.mxu0 0.0
        %932 = vmatpush1.msra.mxu0 0.0
        %933 = vmatprep.subr.mxu0 0.0
        %934 = vmatpush1.msra.mxu0 0.0
        %935 = vmatprep.subr.mxu0 0.0
        %936 = vmatpush1.msra.mxu0 0.0
        %937 = vmatprep.subr.mxu0 0.0
        %938 = vmatpush1.msra.mxu0 0.0
        %939 = vmatprep.subr.mxu0 0.0
        %940 = vmatpush1.msra.mxu0 0.0
        %941 = vmatprep.mubr.f32.mxu0 0.0
        %942 = vmatmul.mubr.f32.gmra.mrb[0].mxu0 %v875
        %v943 = vpop.f32.mrb[0].mxu0
        %v944 = vadd.f32 0.0, %v943
        %v945 = vpop.f32.mrb[0].mxu0
        %946 = vdwg.mxu0
        %947 = vrot.lane.b32.xlu0 %v614, 120
        %v948 = vpop.permute.xlu0 %947
        %949 = vrot.lane.b32.xlu0 %v698, 120
        %v950 = vpop.permute.xlu0 %949
        %v951 = vsel %vm785, %v948, 0
        %v953 = vsel %vm785, %v950, 0
        %955 = vmatprep.subr.mxu0 0.0
        %956 = vmatpush1.xpose.msra.mxu0 %v953
        %957 = vmatprep.subr.mxu0 0.0
        %958 = vmatpush1.xpose.msra.mxu0 0.0
        %959 = vmatprep.subr.mxu0 0.0
        %960 = vmatpush1.xpose.msra.mxu0 0.0
        %961 = vmatprep.subr.mxu0 0.0
        %962 = vmatpush1.xpose.msra.mxu0 0.0
        %963 = vmatprep.subr.mxu0 0.0
        %964 = vmatpush1.xpose.msra.mxu0 0.0
        %965 = vmatprep.subr.mxu0 0.0
        %966 = vmatpush1.xpose.msra.mxu0 0.0
        %967 = vmatprep.subr.mxu0 0.0
        %968 = vmatpush1.xpose.msra.mxu0 0.0
        %969 = vmatprep.subr.mxu0 0.0
        %970 = vmatpush1.xpose.msra.mxu0 0.0
        %971 = vmatprep.subr.mxu0 0.0
        %972 = vmatpush1.xpose.msra.mxu0 0.0
        %973 = vmatprep.subr.mxu0 0.0
        %974 = vmatpush1.xpose.msra.mxu0 0.0
        %975 = vmatprep.subr.mxu0 0.0
        %976 = vmatpush1.xpose.msra.mxu0 0.0
        %977 = vmatprep.subr.mxu0 0.0
        %978 = vmatpush1.xpose.msra.mxu0 0.0
        %979 = vmatprep.subr.mxu0 0.0
        %980 = vmatpush1.xpose.msra.mxu0 0.0
        %981 = vmatprep.subr.mxu0 0.0
        %982 = vmatpush1.xpose.msra.mxu0 0.0
        %983 = vmatprep.subr.mxu0 0.0
        %984 = vmatpush1.xpose.msra.mxu0 0.0
        %985 = vmatprep.subr.mxu0 0.0
        %986 = vmatpush1.xpose.msra.mxu0 0.0
        %987 = vmatprep.subr.mxu0 0.0
        %988 = vmatpush1.xpose.msra.mxu0 0.0
        %989 = vmatprep.subr.mxu0 0.0
        %990 = vmatpush1.xpose.msra.mxu0 0.0
        %991 = vmatprep.subr.mxu0 0.0
        %992 = vmatpush1.xpose.msra.mxu0 0.0
        %993 = vmatprep.subr.mxu0 0.0
        %994 = vmatpush1.xpose.msra.mxu0 0.0
        %995 = vmatprep.subr.mxu0 0.0
        %996 = vmatpush1.xpose.msra.mxu0 0.0
        %997 = vmatprep.subr.mxu0 0.0
        %998 = vmatpush1.xpose.msra.mxu0 0.0
        %999 = vmatprep.subr.mxu0 0.0
        %1000 = vmatpush1.xpose.msra.mxu0 0.0
        %1001 = vmatprep.subr.mxu0 0.0
        %1002 = vmatpush1.xpose.msra.mxu0 0.0
        %1003 = vmatprep.subr.mxu0 0.0
        %1004 = vmatpush1.xpose.msra.mxu0 0.0
        %1005 = vmatprep.subr.mxu0 0.0
        %1006 = vmatpush1.xpose.msra.mxu0 0.0
        %1007 = vmatprep.subr.mxu0 0.0
        %1008 = vmatpush1.xpose.msra.mxu0 0.0
        %1009 = vmatprep.subr.mxu0 0.0
        %1010 = vmatpush1.xpose.msra.mxu0 0.0
        %1011 = vmatprep.subr.mxu0 0.0
        %1012 = vmatpush1.xpose.msra.mxu0 0.0
        %1013 = vmatprep.subr.mxu0 0.0
        %1014 = vmatpush1.xpose.msra.mxu0 0.0
        %1015 = vmatprep.subr.mxu0 0.0
        %1016 = vmatpush1.xpose.msra.mxu0 0.0
        %1017 = vmatprep.subr.mxu0 0.0
        %1018 = vmatpush1.xpose.msra.mxu0 0.0
        %1019 = vmatprep.mubr.f32.mxu0 0.0
        %1020 = vmatmul.mubr.f32.gmra.mrb[0].mxu0 %v951
        %v1021 = vpop.f32.mrb[0].mxu0
        %v1022 = vadd.f32 0.0, %v1021
        %v1023 = vpop.f32.mrb[0].mxu0
        %1024 = vdwg.mxu0
        %v1025 = vmul.f32 %v1022, 0.35355338
        %v1026 = vsel %vm785, %v1025, -inf
        %1027 = vmax.xlane.f32.xlu0 %v1026
        %v1028 = vpop.xlane.xlu0 %1027
        %v1029 = vsub.f32 %v1025, %v1028
        %v1030 = vmul.f32 %v1029, 1.442695
        %v1031 = vpow.pop %v1030
        %v1032 = vsel %vm785, %v1031, 0.0
        %1033 = vadd.xlane.f32.xlu0 %v1032
        %v1034 = vpop.xlane.xlu0 %1033
        %v1035 = vrcp.pop %v1034
        %v1036 = vmul.f32 %v1031, %v1035
        %1038 = vrot.lane.b32.xlu0 %v782, 120
        %v1039 = vpop.permute.xlu0 %1038
        %v1042 = vsel %vm785, %v1036, 0
        %1044 = vmatprep.subr.mxu0 0.0
        %1045 = vmatpush1.msra.mxu0 %v1039
        %1046 = vmatprep.subr.mxu0 0.0
        %1047 = vmatpush1.msra.mxu0 0.0
        %1048 = vmatprep.subr.mxu0 0.0
        %1049 = vmatpush1.msra.mxu0 0.0
        %1050 = vmatprep.subr.mxu0 0.0
        %1051 = vmatpush1.msra.mxu0 0.0
        %1052 = vmatprep.subr.mxu0 0.0
        %1053 = vmatpush1.msra.mxu0 0.0
        %1054 = vmatprep.subr.mxu0 0.0
        %1055 = vmatpush1.msra.mxu0 0.0
        %1056 = vmatprep.subr.mxu0 0.0
        %1057 = vmatpush1.msra.mxu0 0.0
        %1058 = vmatprep.subr.mxu0 0.0
        %1059 = vmatpush1.msra.mxu0 0.0
        %1060 = vmatprep.subr.mxu0 0.0
        %1061 = vmatpush1.msra.mxu0 0.0
        %1062 = vmatprep.subr.mxu0 0.0
        %1063 = vmatpush1.msra.mxu0 0.0
        %1064 = vmatprep.subr.mxu0 0.0
        %1065 = vmatpush1.msra.mxu0 0.0
        %1066 = vmatprep.subr.mxu0 0.0
        %1067 = vmatpush1.msra.mxu0 0.0
        %1068 = vmatprep.subr.mxu0 0.0
        %1069 = vmatpush1.msra.mxu0 0.0
        %1070 = vmatprep.subr.mxu0 0.0
        %1071 = vmatpush1.msra.mxu0 0.0
        %1072 = vmatprep.subr.mxu0 0.0
        %1073 = vmatpush1.msra.mxu0 0.0
        %1074 = vmatprep.subr.mxu0 0.0
        %1075 = vmatpush1.msra.mxu0 0.0
        %1076 = vmatprep.subr.mxu0 0.0
        %1077 = vmatpush1.msra.mxu0 0.0
        %1078 = vmatprep.subr.mxu0 0.0
        %1079 = vmatpush1.msra.mxu0 0.0
        %1080 = vmatprep.subr.mxu0 0.0
        %1081 = vmatpush1.msra.mxu0 0.0
        %1082 = vmatprep.subr.mxu0 0.0
        %1083 = vmatpush1.msra.mxu0 0.0
        %1084 = vmatprep.subr.mxu0 0.0
        %1085 = vmatpush1.msra.mxu0 0.0
        %1086 = vmatprep.subr.mxu0 0.0
        %1087 = vmatpush1.msra.mxu0 0.0
        %1088 = vmatprep.subr.mxu0 0.0
        %1089 = vmatpush1.msra.mxu0 0.0
        %1090 = vmatprep.subr.mxu0 0.0
        %1091 = vmatpush1.msra.mxu0 0.0
        %1092 = vmatprep.subr.mxu0 0.0
        %1093 = vmatpush1.msra.mxu0 0.0
        %1094 = vmatprep.subr.mxu0 0.0
        %1095 = vmatpush1.msra.mxu0 0.0
        %1096 = vmatprep.subr.mxu0 0.0
        %1097 = vmatpush1.msra.mxu0 0.0
        %1098 = vmatprep.subr.mxu0 0.0
        %1099 = vmatpush1.msra.mxu0 0.0
        %1100 = vmatprep.subr.mxu0 0.0
        %1101 = vmatpush1.msra.mxu0 0.0
        %1102 = vmatprep.subr.mxu0 0.0
        %1103 = vmatpush1.msra.mxu0 0.0
        %1104 = vmatprep.subr.mxu0 0.0
        %1105 = vmatpush1.msra.mxu0 0.0
        %1106 = vmatprep.subr.mxu0 0.0
        %1107 = vmatpush1.msra.mxu0 0.0
        %1108 = vmatprep.mubr.f32.mxu0 0.0
        %1109 = vmatmul.mubr.f32.gmra.mrb[0].mxu0 %v1042
        %v1110 = vpop.f32.mrb[0].mxu0
        %v1111 = vadd.f32 0.0, %v1110
        %v1112 = vpop.f32.mrb[0].mxu0
        %1113 = vdwg.mxu0
        %1114 = vrot.lane.b32.xlu0 %v614, 112
        %v1115 = vpop.permute.xlu0 %1114
        %1116 = vrot.lane.b32.xlu0 %v698, 112
        %v1117 = vpop.permute.xlu0 %1116
        %v1118 = vsel %vm785, %v1115, 0
        %v1120 = vsel %vm785, %v1117, 0
        %1122 = vmatprep.subr.mxu0 0.0
        %1123 = vmatpush1.xpose.msra.mxu0 %v1120
        %1124 = vmatprep.subr.mxu0 0.0
        %1125 = vmatpush1.xpose.msra.mxu0 0.0
        %1126 = vmatprep.subr.mxu0 0.0
        %1127 = vmatpush1.xpose.msra.mxu0 0.0
        %1128 = vmatprep.subr.mxu0 0.0
        %1129 = vmatpush1.xpose.msra.mxu0 0.0
        %1130 = vmatprep.subr.mxu0 0.0
        %1131 = vmatpush1.xpose.msra.mxu0 0.0
        %1132 = vmatprep.subr.mxu0 0.0
        %1133 = vmatpush1.xpose.msra.mxu0 0.0
        %1134 = vmatprep.subr.mxu0 0.0
        %1135 = vmatpush1.xpose.msra.mxu0 0.0
        %1136 = vmatprep.subr.mxu0 0.0
        %1137 = vmatpush1.xpose.msra.mxu0 0.0
        %1138 = vmatprep.subr.mxu0 0.0
        %1139 = vmatpush1.xpose.msra.mxu0 0.0
        %1140 = vmatprep.subr.mxu0 0.0
        %1141 = vmatpush1.xpose.msra.mxu0 0.0
        %1142 = vmatprep.subr.mxu0 0.0
        %1143 = vmatpush1.xpose.msra.mxu0 0.0
        %1144 = vmatprep.subr.mxu0 0.0
        %1145 = vmatpush1.xpose.msra.mxu0 0.0
        %1146 = vmatprep.subr.mxu0 0.0
        %1147 = vmatpush1.xpose.msra.mxu0 0.0
        %1148 = vmatprep.subr.mxu0 0.0
        %1149 = vmatpush1.xpose.msra.mxu0 0.0
        %1150 = vmatprep.subr.mxu0 0.0
        %1151 = vmatpush1.xpose.msra.mxu0 0.0
        %1152 = vmatprep.subr.mxu0 0.0
        %1153 = vmatpush1.xpose.msra.mxu0 0.0
        %1154 = vmatprep.subr.mxu0 0.0
        %1155 = vmatpush1.xpose.msra.mxu0 0.0
        %1156 = vmatprep.subr.mxu0 0.0
        %1157 = vmatpush1.xpose.msra.mxu0 0.0
        %1158 = vmatprep.subr.mxu0 0.0
        %1159 = vmatpush1.xpose.msra.mxu0 0.0
        %1160 = vmatprep.subr.mxu0 0.0
        %1161 = vmatpush1.xpose.msra.mxu0 0.0
        %1162 = vmatprep.subr.mxu0 0.0
        %1163 = vmatpush1.xpose.msra.mxu0 0.0
        %1164 = vmatprep.subr.mxu0 0.0
        %1165 = vmatpush1.xpose.msra.mxu0 0.0
        %1166 = vmatprep.subr.mxu0 0.0
        %1167 = vmatpush1.xpose.msra.mxu0 0.0
        %1168 = vmatprep.subr.mxu0 0.0
        %1169 = vmatpush1.xpose.msra.mxu0 0.0
        %1170 = vmatprep.subr.mxu0 0.0
        %1171 = vmatpush1.xpose.msra.mxu0 0.0
        %1172 = vmatprep.subr.mxu0 0.0
        %1173 = vmatpush1.xpose.msra.mxu0 0.0
        %1174 = vmatprep.subr.mxu0 0.0
        %1175 = vmatpush1.xpose.msra.mxu0 0.0
        %1176 = vmatprep.subr.mxu0 0.0
        %1177 = vmatpush1.xpose.msra.mxu0 0.0
        %1178 = vmatprep.subr.mxu0 0.0
        %1179 = vmatpush1.xpose.msra.mxu0 0.0
        %1180 = vmatprep.subr.mxu0 0.0
        %1181 = vmatpush1.xpose.msra.mxu0 0.0
        %1182 = vmatprep.subr.mxu0 0.0
        %1183 = vmatpush1.xpose.msra.mxu0 0.0
        %1184 = vmatprep.subr.mxu0 0.0
        %1185 = vmatpush1.xpose.msra.mxu0 0.0
        %1186 = vmatprep.mubr.f32.mxu0 0.0
        %1187 = vmatmul.mubr.f32.gmra.mrb[0].mxu0 %v1118
        %v1188 = vpop.f32.mrb[0].mxu0
        %v1189 = vadd.f32 0.0, %v1188
        %v1190 = vpop.f32.mrb[0].mxu0
        %1191 = vdwg.mxu0
        %v1192 = vmul.f32 %v1189, 0.35355338
        %v1193 = vsel %vm785, %v1192, -inf
        %1194 = vmax.xlane.f32.xlu0 %v1193
        %v1195 = vpop.xlane.xlu0 %1194
        %v1196 = vsub.f32 %v1192, %v1195
        %v1197 = vmul.f32 %v1196, 1.442695
        %v1198 = vpow.pop %v1197
        %v1199 = vsel %vm785, %v1198, 0.0
        %1200 = vadd.xlane.f32.xlu0 %v1199
        %v1201 = vpop.xlane.xlu0 %1200
        %v1202 = vrcp.pop %v1201
        %v1203 = vmul.f32 %v1198, %v1202
        %1204 = vrot.lane.b32.xlu0 %v782, 112
        %v1205 = vpop.permute.xlu0 %1204
        %v1208 = vsel %vm785, %v1203, 0
        %1210 = vmatprep.subr.mxu0 0.0
        %1211 = vmatpush1.msra.mxu0 %v1205
        %1212 = vmatprep.subr.mxu0 0.0
        %1213 = vmatpush1.msra.mxu0 0.0
        %1214 = vmatprep.subr.mxu0 0.0
        %1215 = vmatpush1.msra.mxu0 0.0
        %1216 = vmatprep.subr.mxu0 0.0
        %1217 = vmatpush1.msra.mxu0 0.0
        %1218 = vmatprep.subr.mxu0 0.0
        %1219 = vmatpush1.msra.mxu0 0.0
        %1220 = vmatprep.subr.mxu0 0.0
        %1221 = vmatpush1.msra.mxu0 0.0
        %1222 = vmatprep.subr.mxu0 0.0
        %1223 = vmatpush1.msra.mxu0 0.0
        %1224 = vmatprep.subr.mxu0 0.0
        %1225 = vmatpush1.msra.mxu0 0.0
        %1226 = vmatprep.subr.mxu0 0.0
        %1227 = vmatpush1.msra.mxu0 0.0
        %1228 = vmatprep.subr.mxu0 0.0
        %1229 = vmatpush1.msra.mxu0 0.0
        %1230 = vmatprep.subr.mxu0 0.0
        %1231 = vmatpush1.msra.mxu0 0.0
        %1232 = vmatprep.subr.mxu0 0.0
        %1233 = vmatpush1.msra.mxu0 0.0
        %1234 = vmatprep.subr.mxu0 0.0
        %1235 = vmatpush1.msra.mxu0 0.0
        %1236 = vmatprep.subr.mxu0 0.0
        %1237 = vmatpush1.msra.mxu0 0.0
        %1238 = vmatprep.subr.mxu0 0.0
        %1239 = vmatpush1.msra.mxu0 0.0
        %1240 = vmatprep.subr.mxu0 0.0
        %1241 = vmatpush1.msra.mxu0 0.0
        %1242 = vmatprep.subr.mxu0 0.0
        %1243 = vmatpush1.msra.mxu0 0.0
        %1244 = vmatprep.subr.mxu0 0.0
        %1245 = vmatpush1.msra.mxu0 0.0
        %1246 = vmatprep.subr.mxu0 0.0
        %1247 = vmatpush1.msra.mxu0 0.0
        %1248 = vmatprep.subr.mxu0 0.0
        %1249 = vmatpush1.msra.mxu0 0.0
        %1250 = vmatprep.subr.mxu0 0.0
        %1251 = vmatpush1.msra.mxu0 0.0
        %1252 = vmatprep.subr.mxu0 0.0
        %1253 = vmatpush1.msra.mxu0 0.0
        %1254 = vmatprep.subr.mxu0 0.0
        %1255 = vmatpush1.msra.mxu0 0.0
        %1256 = vmatprep.subr.mxu0 0.0
        %1257 = vmatpush1.msra.mxu0 0.0
        %1258 = vmatprep.subr.mxu0 0.0
        %1259 = vmatpush1.msra.mxu0 0.0
        %1260 = vmatprep.subr.mxu0 0.0
        %1261 = vmatpush1.msra.mxu0 0.0
        %1262 = vmatprep.subr.mxu0 0.0
        %1263 = vmatpush1.msra.mxu0 0.0
        %1264 = vmatprep.subr.mxu0 0.0
        %1265 = vmatpush1.msra.mxu0 0.0
        %1266 = vmatprep.subr.mxu0 0.0
        %1267 = vmatpush1.msra.mxu0 0.0
        %1268 = vmatprep.subr.mxu0 0.0
        %1269 = vmatpush1.msra.mxu0 0.0
        %1270 = vmatprep.subr.mxu0 0.0
        %1271 = vmatpush1.msra.mxu0 0.0
        %1272 = vmatprep.subr.mxu0 0.0
        %1273 = vmatpush1.msra.mxu0 0.0
        %1274 = vmatprep.mubr.f32.mxu0 0.0
        %1275 = vmatmul.mubr.f32.gmra.mrb[0].mxu0 %v1208
        %v1276 = vpop.f32.mrb[0].mxu0
        %v1277 = vadd.f32 0.0, %v1276
        %v1278 = vpop.f32.mrb[0].mxu0
        %1279 = vdwg.mxu0
        %1280 = vrot.lane.b32.xlu0 %v614, 104
        %v1281 = vpop.permute.xlu0 %1280
        %1282 = vrot.lane.b32.xlu0 %v698, 104
        %v1283 = vpop.permute.xlu0 %1282
        %v1284 = vsel %vm785, %v1281, 0
        %v1286 = vsel %vm785, %v1283, 0
        %1288 = vmatprep.subr.mxu0 0.0
        %1289 = vmatpush1.xpose.msra.mxu0 %v1286
        %1290 = vmatprep.subr.mxu0 0.0
        %1291 = vmatpush1.xpose.msra.mxu0 0.0
        %1292 = vmatprep.subr.mxu0 0.0
        %1293 = vmatpush1.xpose.msra.mxu0 0.0
        %1294 = vmatprep.subr.mxu0 0.0
        %1295 = vmatpush1.xpose.msra.mxu0 0.0
        %1296 = vmatprep.subr.mxu0 0.0
        %1297 = vmatpush1.xpose.msra.mxu0 0.0
        %1298 = vmatprep.subr.mxu0 0.0
        %1299 = vmatpush1.xpose.msra.mxu0 0.0
        %1300 = vmatprep.subr.mxu0 0.0
        %1301 = vmatpush1.xpose.msra.mxu0 0.0
        %1302 = vmatprep.subr.mxu0 0.0
        %1303 = vmatpush1.xpose.msra.mxu0 0.0
        %1304 = vmatprep.subr.mxu0 0.0
        %1305 = vmatpush1.xpose.msra.mxu0 0.0
        %1306 = vmatprep.subr.mxu0 0.0
        %1307 = vmatpush1.xpose.msra.mxu0 0.0
        %1308 = vmatprep.subr.mxu0 0.0
        %1309 = vmatpush1.xpose.msra.mxu0 0.0
        %1310 = vmatprep.subr.mxu0 0.0
        %1311 = vmatpush1.xpose.msra.mxu0 0.0
        %1312 = vmatprep.subr.mxu0 0.0
        %1313 = vmatpush1.xpose.msra.mxu0 0.0
        %1314 = vmatprep.subr.mxu0 0.0
        %1315 = vmatpush1.xpose.msra.mxu0 0.0
        %1316 = vmatprep.subr.mxu0 0.0
        %1317 = vmatpush1.xpose.msra.mxu0 0.0
        %1318 = vmatprep.subr.mxu0 0.0
        %1319 = vmatpush1.xpose.msra.mxu0 0.0
        %1320 = vmatprep.subr.mxu0 0.0
        %1321 = vmatpush1.xpose.msra.mxu0 0.0
        %1322 = vmatprep.subr.mxu0 0.0
        %1323 = vmatpush1.xpose.msra.mxu0 0.0
        %1324 = vmatprep.subr.mxu0 0.0
        %1325 = vmatpush1.xpose.msra.mxu0 0.0
        %1326 = vmatprep.subr.mxu0 0.0
        %1327 = vmatpush1.xpose.msra.mxu0 0.0
        %1328 = vmatprep.subr.mxu0 0.0
        %1329 = vmatpush1.xpose.msra.mxu0 0.0
        %1330 = vmatprep.subr.mxu0 0.0
        %1331 = vmatpush1.xpose.msra.mxu0 0.0
        %1332 = vmatprep.subr.mxu0 0.0
        %1333 = vmatpush1.xpose.msra.mxu0 0.0
        %1334 = vmatprep.subr.mxu0 0.0
        %1335 = vmatpush1.xpose.msra.mxu0 0.0
        %1336 = vmatprep.subr.mxu0 0.0
        %1337 = vmatpush1.xpose.msra.mxu0 0.0
        %1338 = vmatprep.subr.mxu0 0.0
        %1339 = vmatpush1.xpose.msra.mxu0 0.0
        %1340 = vmatprep.subr.mxu0 0.0
        %1341 = vmatpush1.xpose.msra.mxu0 0.0
        %1342 = vmatprep.subr.mxu0 0.0
        %1343 = vmatpush1.xpose.msra.mxu0 0.0
        %1344 = vmatprep.subr.mxu0 0.0
        %1345 = vmatpush1.xpose.msra.mxu0 0.0
        %1346 = vmatprep.subr.mxu0 0.0
        %1347 = vmatpush1.xpose.msra.mxu0 0.0
        %1348 = vmatprep.subr.mxu0 0.0
        %1349 = vmatpush1.xpose.msra.mxu0 0.0
        %1350 = vmatprep.subr.mxu0 0.0
        %1351 = vmatpush1.xpose.msra.mxu0 0.0
        %1352 = vmatprep.mubr.f32.mxu0 0.0
        %1353 = vmatmul.mubr.f32.gmra.mrb[0].mxu0 %v1284
        %v1354 = vpop.f32.mrb[0].mxu0
        %v1355 = vadd.f32 0.0, %v1354
        %v1356 = vpop.f32.mrb[0].mxu0
        %1357 = vdwg.mxu0
        %v1358 = vmul.f32 %v1355, 0.35355338
        %v1359 = vsel %vm785, %v1358, -inf
        %1360 = vmax.xlane.f32.xlu0 %v1359
        %v1361 = vpop.xlane.xlu0 %1360
        %v1362 = vsub.f32 %v1358, %v1361
        %v1363 = vmul.f32 %v1362, 1.442695
        %v1364 = vpow.pop %v1363
        %v1365 = vsel %vm785, %v1364, 0.0
        %1366 = vadd.xlane.f32.xlu0 %v1365
        %v1367 = vpop.xlane.xlu0 %1366
        %v1368 = vrcp.pop %v1367
        %v1369 = vmul.f32 %v1364, %v1368
        %1370 = vrot.lane.b32.xlu0 %v782, 104
        %v1371 = vpop.permute.xlu0 %1370
        %v1374 = vsel %vm785, %v1369, 0
        %1376 = vmatprep.subr.mxu0 0.0
        %1377 = vmatpush1.msra.mxu0 %v1371
        %1378 = vmatprep.subr.mxu0 0.0
        %1379 = vmatpush1.msra.mxu0 0.0
        %1380 = vmatprep.subr.mxu0 0.0
        %1381 = vmatpush1.msra.mxu0 0.0
        %1382 = vmatprep.subr.mxu0 0.0
        %1383 = vmatpush1.msra.mxu0 0.0
        %1384 = vmatprep.subr.mxu0 0.0
        %1385 = vmatpush1.msra.mxu0 0.0
        %1386 = vmatprep.subr.mxu0 0.0
        %1387 = vmatpush1.msra.mxu0 0.0
        %1388 = vmatprep.subr.mxu0 0.0
        %1389 = vmatpush1.msra.mxu0 0.0
        %1390 = vmatprep.subr.mxu0 0.0
        %1391 = vmatpush1.msra.mxu0 0.0
        %1392 = vmatprep.subr.mxu0 0.0
        %1393 = vmatpush1.msra.mxu0 0.0
        %1394 = vmatprep.subr.mxu0 0.0
        %1395 = vmatpush1.msra.mxu0 0.0
        %1396 = vmatprep.subr.mxu0 0.0
        %1397 = vmatpush1.msra.mxu0 0.0
        %1398 = vmatprep.subr.mxu0 0.0
        %1399 = vmatpush1.msra.mxu0 0.0
        %1400 = vmatprep.subr.mxu0 0.0
        %1401 = vmatpush1.msra.mxu0 0.0
        %1402 = vmatprep.subr.mxu0 0.0
        %1403 = vmatpush1.msra.mxu0 0.0
        %1404 = vmatprep.subr.mxu0 0.0
        %1405 = vmatpush1.msra.mxu0 0.0
        %1406 = vmatprep.subr.mxu0 0.0
        %1407 = vmatpush1.msra.mxu0 0.0
        %1408 = vmatprep.subr.mxu0 0.0
        %1409 = vmatpush1.msra.mxu0 0.0
        %1410 = vmatprep.subr.mxu0 0.0
        %1411 = vmatpush1.msra.mxu0 0.0
        %1412 = vmatprep.subr.mxu0 0.0
        %1413 = vmatpush1.msra.mxu0 0.0
        %1414 = vmatprep.subr.mxu0 0.0
        %1415 = vmatpush1.msra.mxu0 0.0
        %1416 = vmatprep.subr.mxu0 0.0
        %1417 = vmatpush1.msra.mxu0 0.0
        %1418 = vmatprep.subr.mxu0 0.0
        %1419 = vmatpush1.msra.mxu0 0.0
        %1420 = vmatprep.subr.mxu0 0.0
        %1421 = vmatpush1.msra.mxu0 0.0
        %1422 = vmatprep.subr.mxu0 0.0
        %1423 = vmatpush1.msra.mxu0 0.0
        %1424 = vmatprep.subr.mxu0 0.0
        %1425 = vmatpush1.msra.mxu0 0.0
        %1426 = vmatprep.subr.mxu0 0.0
        %1427 = vmatpush1.msra.mxu0 0.0
        %1428 = vmatprep.subr.mxu0 0.0
        %1429 = vmatpush1.msra.mxu0 0.0
        %1430 = vmatprep.subr.mxu0 0.0
        %1431 = vmatpush1.msra.mxu0 0.0
        %1432 = vmatprep.subr.mxu0 0.0
        %1433 = vmatpush1.msra.mxu0 0.0
        %1434 = vmatprep.subr.mxu0 0.0
        %1435 = vmatpush1.msra.mxu0 0.0
        %1436 = vmatprep.subr.mxu0 0.0
        %1437 = vmatpush1.msra.mxu0 0.0
        %1438 = vmatprep.subr.mxu0 0.0
        %1439 = vmatpush1.msra.mxu0 0.0
        %1440 = vmatprep.mubr.f32.mxu0 0.0
        %1441 = vmatmul.mubr.f32.gmra.mrb[0].mxu0 %v1374
        %v1442 = vpop.f32.mrb[0].mxu0
        %v1443 = vadd.f32 0.0, %v1442
        %v1444 = vpop.f32.mrb[0].mxu0
        %1445 = vdwg.mxu0
        %1447 = vrot.lane.b32.xlu0 %v1111, 8
        %v1448 = vpop.permute.xlu0 %1447
        %1451 = vrot.lane.b32.xlu0 %v1277, 16
        %v1452 = vpop.permute.xlu0 %1451
        %1455 = vrot.lane.b32.xlu0 %v1443, 24
        %v1456 = vpop.permute.xlu0 %1455
        %v1458 = vsel %vm785, %v944, %v1448
        %vm1459 = vcmask 130048
        %v1460 = vsel %vm1459, %v1458, %v1452
        %vm1461 = vcmask 195584
        %v1462 = vsel %vm1461, %v1460, %v1456
        %v1463 = vld [vmem:[%s9] sm:$0xff]
        %v1464 = vld [vmem:[%s9 + $0x8] sm:$0xff]
        %v1465 = vld [vmem:[%s9 + $0x10] sm:$0xff]
        %v1466 = vld [vmem:[%s9 + $0x18] sm:$0xff]
        %v1467 = vld [vmem:[%s10] sm:$0x1]
        %v1469 = vlaneseq
        %v1470 = vshrl.u32 %v1469, 7
        %v1471 = vsub.s32 0, %v1470
        %v1472 = vrot.slane %v1467, %v1471
        %v1475 = vsel %vm543, %v1462, 0
        %1477 = vmatprep.subr.mxu0 0.0
        %1478 = vmatpush1.msra.mxu0 %v1463
        %1479 = vmatprep.subr.mxu0 0.0
        %1480 = vmatpush1.msra.mxu0 %v1464
        %1481 = vmatprep.subr.mxu0 0.0
        %1482 = vmatpush1.msra.mxu0 %v1465
        %1483 = vmatprep.subr.mxu0 0.0
        %1484 = vmatpush1.msra.mxu0 %v1466
        %1485 = vmatprep.subr.mxu0 0.0
        %1486 = vmatpush1.msra.mxu0 0.0
        %1487 = vmatprep.subr.mxu0 0.0
        %1488 = vmatpush1.msra.mxu0 0.0
        %1489 = vmatprep.subr.mxu0 0.0
        %1490 = vmatpush1.msra.mxu0 0.0
        %1491 = vmatprep.subr.mxu0 0.0
        %1492 = vmatpush1.msra.mxu0 0.0
        %1493 = vmatprep.subr.mxu0 0.0
        %1494 = vmatpush1.msra.mxu0 0.0
        %1495 = vmatprep.subr.mxu0 0.0
        %1496 = vmatpush1.msra.mxu0 0.0
        %1497 = vmatprep.subr.mxu0 0.0
        %1498 = vmatpush1.msra.mxu0 0.0
        %1499 = vmatprep.subr.mxu0 0.0
        %1500 = vmatpush1.msra.mxu0 0.0
        %1501 = vmatprep.subr.mxu0 0.0
        %1502 = vmatpush1.msra.mxu0 0.0
        %1503 = vmatprep.subr.mxu0 0.0
        %1504 = vmatpush1.msra.mxu0 0.0
        %1505 = vmatprep.subr.mxu0 0.0
        %1506 = vmatpush1.msra.mxu0 0.0
        %1507 = vmatprep.subr.mxu0 0.0
        %1508 = vmatpush1.msra.mxu0 0.0
        %1509 = vmatprep.subr.mxu0 0.0
        %1510 = vmatpush1.msra.mxu0 0.0
        %1511 = vmatprep.subr.mxu0 0.0
        %1512 = vmatpush1.msra.mxu0 0.0
        %1513 = vmatprep.subr.mxu0 0.0
        %1514 = vmatpush1.msra.mxu0 0.0
        %1515 = vmatprep.subr.mxu0 0.0
        %1516 = vmatpush1.msra.mxu0 0.0
        %1517 = vmatprep.subr.mxu0 0.0
        %1518 = vmatpush1.msra.mxu0 0.0
        %1519 = vmatprep.subr.mxu0 0.0
        %1520 = vmatpush1.msra.mxu0 0.0
        %1521 = vmatprep.subr.mxu0 0.0
        %1522 = vmatpush1.msra.mxu0 0.0
        %1523 = vmatprep.subr.mxu0 0.0
        %1524 = vmatpush1.msra.mxu0 0.0
        %1525 = vmatprep.subr.mxu0 0.0
        %1526 = vmatpush1.msra.mxu0 0.0
        %1527 = vmatprep.subr.mxu0 0.0
        %1528 = vmatpush1.msra.mxu0 0.0
        %1529 = vmatprep.subr.mxu0 0.0
        %1530 = vmatpush1.msra.mxu0 0.0
        %1531 = vmatprep.subr.mxu0 0.0
        %1532 = vmatpush1.msra.mxu0 0.0
        %1533 = vmatprep.subr.mxu0 0.0
        %1534 = vmatpush1.msra.mxu0 0.0
        %1535 = vmatprep.subr.mxu0 0.0
        %1536 = vmatpush1.msra.mxu0 0.0
        %1537 = vmatprep.subr.mxu0 0.0
        %1538 = vmatpush1.msra.mxu0 0.0
        %1539 = vmatprep.subr.mxu0 0.0
        %1540 = vmatpush1.msra.mxu0 0.0
        %1541 = vmatprep.mubr.f32.mxu0 0.0
        %1542 = vmatmul.mubr.f32.gmra.mrb[0].mxu0 %v1475
        %v1543 = vpop.f32.mrb[0].mxu0
        %v1544 = vadd.f32 %v1472, %v1543
        %v1545 = vpop.f32.mrb[0].mxu0
        %1546 = vdwg.mxu0
        %1547 = vst.msk [vmem:[%s528] sm:$0xff] %vm543, %v1544
        %s1548 = sand.u32 %s287, 1
        %s1549 = scalar_lea.sflag [#allocation4], %s1548
        %s1550 = sand.u32 %s287, 1
        %s1551 = smul.addr %s1550, 8
        %s1552 = scalar_lea.vmem [#allocation14], %s1551
        // Predicated region
        $region93: #{tpu_custom_call.1} parent=63 // pred_check
          %p1553 = pneg %p297
        $region94: #{tpu_custom_call.1} parent=63 // pred_check_branch
          %1555 = sbr.rel (%p1553) target = $region96
        $region95: #{tpu_custom_call.1} parent=63 // pred_region
          %s1557 = ssub.s32 128, 128
          %1558 = vsyncadd %s1549, %s1557
          %s1559 = smul.addr %s33, 128
          %s1560 = scalar_lea.hbm %s11, %s1559
          %s1562 = sshll.u32 %s1552, 4
          %s1563 = int_to_ptr.vmem [resolvable:$true] %s1562
          %1565 = dma.vmem_to_hbm [thread:$0]  %s1563, 128, %s1560, %s1549
        $region96: #{tpu_custom_call.1} parent=63 // pred_fallthru
          _
      $region64: #{tpu_custom_call.1} parent=5 // pred_fallthru
        _
      %p1566 = scmp.le.s32.totalorder 2, %s28
      // Predicated region
      $region97: #{tpu_custom_call.1} parent=5 // pred_check
        %p1567 = pneg %p1566
      $region98: #{tpu_custom_call.1} parent=5 // pred_check_branch
        %1569 = sbr.rel (%p1567) target = $region100
      $region99: #{tpu_custom_call.1} parent=5 // pred_region
        %s1570 = ssub.s32 %s28, 2
        // Predicated region
        $region101: #{tpu_custom_call.1} parent=99 // pred_check
          %p1571 = pneg %p303
        $region102: #{tpu_custom_call.1} parent=99 // pred_check_branch
          %1573 = sbr.rel (%p1571) target = $region104
        $region103: #{tpu_custom_call.1} parent=99 // pred_region
          %s1574 = sand.u32 %s288, 1
          %s1575 = scalar_lea.sflag [#allocation4], %s1574
          %s1576 = sand.u32 %s288, 1
          %s1577 = smul.addr %s1576, 8
          %s1578 = scalar_lea.vmem [#allocation14], %s1577
          %1579 = dma.done %s1575, 128
        $region104: #{tpu_custom_call.1} parent=99 // pred_fallthru
          _
      $region100: #{tpu_custom_call.1} parent=5 // pred_fallthru
        _
    $region6: #{tpu_custom_call.1} parent=1 // loop_footer
      %s32 = sadd.s32 1, %s28
    $region7: #{tpu_custom_call.1} parent=1 // loop_footer_branch
      %27 = sbr.rel target = $region3
    $region8: #{tpu_custom_call.1} parent=1 // loop_exit
      _
    %1580 = vsyncpa [#allocation3], 1
    %s1581 = scalar_lea.sflag [#allocation3], 1
    %1582 = vsyncpa %s1581, 1
    %1583 = vsyncpa [#allocation6], 1
    %s1584 = scalar_lea.sflag [#allocation6], 1
    %1585 = vsyncpa %s1584, 1
    %1586 = vsyncpa [#allocation9], 1
    %1587 = vsyncpa [#allocation12], 1
    %1588 = vsyncpa [#allocation4], 1
    %s1589 = scalar_lea.sflag [#allocation4], 1
    %1590 = vsyncpa %s1589, 1

</llo_original>
